<compile_context>
chip_gen: v6e
topology: v6e:2x2x1
jax: 0.10.0
libtpu: 0.0.40
codegen_flags: <defaults>
</compile_context>

<pallas_src>
import math
import numpy as np
import jax
import jax.numpy as jnp
from jax.experimental import pallas as pl
from jax.experimental.pallas import tpu as pltpu


def pack_params(params, n_features, hidden_size, n_class):
    """One-time parameter preprocessing (hoisted out of the per-call jitted path)."""
    F, H, C = n_features, hidden_size, n_class
    FH = F * H
    CP = ((C + 127) // 128) * 128            # lane-dense padded class dim
    f32 = jnp.float32

    wx = params["Wx"].astype(f32).reshape(1, FH)
    bias = params["rnn_bias"].astype(f32).reshape(1, FH)
    # block-diagonal recurrence matrix: wc_bd[f*H+j, f*H+h] = Wc[f, h, j]
    wc_t = jnp.transpose(params["Wc"].astype(f32), (0, 2, 1))                 # (F, Hin, Hout)
    wc_bd = (jnp.eye(F, dtype=f32)[:, None, :, None]
             * wc_t[:, :, None, :]).reshape(FH, FH)                           # (FH, FH)
    e_one = jnp.repeat(jnp.eye(F, dtype=f32), H, axis=1)                      # (F, FH) expansion
    gath = jnp.tile(jnp.eye(H, dtype=f32), (F, 1))                            # (FH, H) feature-sum
    w1t = params["W1T"].astype(f32)                                           # (H, H)
    b1 = params["b1"].astype(f32)                                             # (1, H)
    # lane-padded head: padded logits get -1e30 so softmax over them is exactly 0
    w2t_pad = jnp.zeros((H, CP), f32).at[:, :C].set(params["W2T"].astype(f32))
    b2_pad = jnp.full((1, CP), -1e30, f32).at[:, :C].set(params["b2"].astype(f32))
    return dict(wx=wx, bias=bias, wc_bd=wc_bd, e_one=e_one, gath=gath,
                w1t=w1t, b1=b1, w2t_pad=w2t_pad, b2_pad=b2_pad)


def make_packet_rnn_forward(n_features, hidden_size, n_class, t_chunk=8):
    F, H, C = n_features, hidden_size, n_class
    FH = F * H
    CP = ((C + 127) // 128) * 128
    TC = t_chunk
    f32 = jnp.float32

    # -------------------- kernel 1: sequential chunked recurrence ---------------------
    def rnn_kernel(x_ref, m_ref, ht0_ref, wx_ref, b_ref, e_ref, wc_ref, g_ref,
                   agg_ref, htf_ref, ht_sc):
        @pl.when(pl.program_id(0) == 0)
        def _init():
            ht_sc[...] = ht0_ref[...]

        x = x_ref[...]                                    # (TC, F) raw packet features
        m = m_ref[...]                                    # (TC, F) raw 0/1 mask
        e = e_ref[...]                                    # (F, FH) one-hot lane expansion

        # lane expansion once per chunk (off the serial path).  hi/lo split keeps the
        # MXU's bf16-operand default precision ~f32-exact for one extra tiny matmul.
        x_hi = x.astype(jnp.bfloat16).astype(jnp.float32)
        x_lo = x - x_hi
        x_rep = (jnp.dot(x_hi, e, preferred_element_type=jnp.float32)
                 + jnp.dot(x_lo, e, preferred_element_type=jnp.float32))      # (TC, FH)
        m_rep = jnp.dot(m, e, preferred_element_type=jnp.float32)             # exact (0/1)
        xt_all = wx_ref[...] * x_rep + b_ref[...]                             # Wx*X + b (VPU)

        step_col = jax.lax.broadcasted_iota(jnp.int32, (TC, 1), 0)            # (TC, 1)
        ht = ht_sc[...]                                                       # (1, FH) carry
        hts = jnp.zeros((TC, FH), jnp.float32)                                # masked Ht rows
        for i in range(TC):               # static unroll; serial dep is only through `ht`
            h_lin = jnp.dot(ht, wc_ref[...],
                            preferred_element_type=jnp.float32)               # Wc @ Ht (MXU)
            cand = jnp.tanh(xt_all[i:i + 1, :] + h_lin)                       # (1, FH)  EUP
            m_row = m_rep[i:i + 1, :]
            ht = jnp.where(m_row > 0.0, cand, ht)                             # masked update
            # place this step's masked hidden row; a 2-vreg value accumulation per chunk
            # (replaces the old O(T^2) full-(T,H)-scratch read-modify-write).
            hts = hts + jnp.where(step_col == i, m_row * ht, 0.0)
        ht_sc[...] = ht
        htf_ref[...] = ht

        # batched per-chunk masked feature mean: one (TC,FH)@(FH,H) matmul (+ lo pass).
        hts_hi = hts.astype(jnp.bfloat16).astype(jnp.float32)
        hts_lo = hts - hts_hi
        ssum = (jnp.dot(hts_hi, g_ref[...], preferred_element_type=jnp.float32)
                + jnp.dot(hts_lo, g_ref[...], preferred_element_type=jnp.float32))  # (TC, H)
        cnt = jnp.sum(m, axis=-1, keepdims=True)                              # (TC, 1)
        agg_ref[...] = ssum / jnp.maximum(cnt, 1.0)                           # exact mean

    # -------------------- kernel 2: parallel MLP head + softmax -----------------------
    def head_kernel(agg_ref, w1t_ref, b1_ref, w2t_ref, b2_ref, pred_ref):
        hidden = jnp.maximum(
            jnp.dot(agg_ref[...], w1t_ref[...], preferred_element_type=jnp.float32)
            + b1_ref[...], 0.0)                                               # (TC, H)
        logits = jnp.dot(hidden, w2t_ref[...],
                         preferred_element_type=jnp.float32) + b2_ref[...]    # (TC, CP)
        mx = jnp.max(logits, axis=-1, keepdims=True)
        ex = jnp.exp(logits - mx)                        # padded lanes: exp(-1e30) == 0
        pred_ref[...] = ex / jnp.sum(ex, axis=-1, keepdims=True)              # exact softmax

    @jax.jit
    def forward(X, mask, Ht0, packed):
        T = X.shape[0]
        n_chunks = (T + TC - 1) // TC
        Tp = n_chunks * TC
        # pad the stream with mask=0 packets (Ht unchanged; padded rows sliced off)
        Xp = jnp.zeros((Tp, F), f32).at[:T].set(X.astype(f32))
        Mp = jnp.zeros((Tp, F), f32).at[:T].set(mask.astype(f32))
        ht0 = Ht0.astype(f32).reshape(1, FH)

        resident = lambda a: pl.BlockSpec(a.shape, lambda c: (0,) * a.ndim)
        stream = pl.BlockSpec((TC, F), lambda c: (c, 0))   # raw per-chunk packet rows

        agg, ht_fin = pl.pallas_call(
            rnn_kernel,
            out_shape=(jax.ShapeDtypeStruct((Tp, H), f32),
                       jax.ShapeDtypeStruct((1, FH), f32)),
            grid_spec=pltpu.PrefetchScalarGridSpec(
                num_scalar_prefetch=0,
                grid=(n_chunks,),
                in_specs=[stream, stream,
                          resident(ht0), resident(packed["wx"]), resident(packed["bias"]),
                          resident(packed["e_one"]), resident(packed["wc_bd"]),
                          resident(packed["gath"])],
                out_specs=(pl.BlockSpec((TC, H), lambda c: (c, 0)),
                           pl.BlockSpec((1, FH), lambda c: (0, 0))),
                scratch_shapes=[pltpu.VMEM((1, FH), f32)],        # carried Ht
            ),
            input_output_aliases={2: 1},                          # Ht0 buffer -> Ht_final
            compiler_params=pltpu.CompilerParams(
                dimension_semantics=("arbitrary",),               # sequential carried state
                vmem_limit_bytes=16 * 1024 * 1024,                # footprint < 1 MiB
            ),
        )(Xp, Mp, ht0, packed["wx"], packed["bias"], packed["e_one"],
          packed["wc_bd"], packed["gath"])

        pred_pad = pl.pallas_call(
            head_kernel,
            out_shape=jax.ShapeDtypeStruct((Tp, CP), f32),
            grid_spec=pltpu.PrefetchScalarGridSpec(
                num_scalar_prefetch=0,
                grid=(n_chunks,),
                in_specs=[pl.BlockSpec((TC, H), lambda c: (c, 0)),
                          resident(packed["w1t"]), resident(packed["b1"]),
                          resident(packed["w2t_pad"]), resident(packed["b2_pad"])],
                out_specs=pl.BlockSpec((TC, CP), lambda c: (c, 0)),
            ),
            compiler_params=pltpu.CompilerParams(
                dimension_semantics=("parallel",),                # head is parallel over T
                vmem_limit_bytes=16 * 1024 * 1024,
            ),
        )(agg, packed["w1t"], packed["b1"], packed["w2t_pad"], packed["b2_pad"])

        return pred_pad[:T, :C], ht_fin.reshape(F, H)

    return forward


def init_params(key, n_features, hidden_size, n_class):
    """Deterministic parameter init, mirroring the PyTorch __init__ shapes."""
    ks = jax.random.split(key, 6)
    he = math.sqrt(2.0 / 1.0)
    # torch: Wx (F, H, 1) -> stored squeezed as (F, H)
    Wx = he * jax.random.normal(ks[0], (n_features, hidden_size), jnp.float32)
    # torch: Wc (F, H, H)
    Wc = he * jax.random.normal(ks[1], (n_features, hidden_size, hidden_size), jnp.float32)
    rnn_bias = jnp.zeros((n_features, hidden_size), jnp.float32)
    # mlp: Linear(H, H) -> ReLU -> Linear(H, C)   (torch Linear weight is (out, in))
    lim1 = 1.0 / math.sqrt(hidden_size)
    W1 = jax.random.uniform(ks[2], (hidden_size, hidden_size), jnp.float32, -lim1, lim1)
    b1 = jax.random.uniform(ks[3], (hidden_size,), jnp.float32, -lim1, lim1)
    W2 = jax.random.uniform(ks[4], (n_class, hidden_size), jnp.float32, -lim1, lim1)
    b2 = jax.random.uniform(ks[5], (n_class,), jnp.float32, -lim1, lim1)
    return {
        "Wx": Wx, "Wc": Wc, "rnn_bias": rnn_bias,
        "W1T": W1.T, "b1": b1.reshape(1, hidden_size),
        "W2T": W2.T, "b2": b2.reshape(1, n_class),
        # un-transposed copies kept for the numpy reference
        "_W1": W1, "_b1": b1, "_W2": W2, "_b2": b2,
    }


def reference_numpy(X, mask, Ht0, params):
    """Pure numpy mirror of the PyTorch forward applied over the packet stream."""
    Xn = np.asarray(X, np.float32)
    Mn = np.asarray(mask, bool)
    Hn = np.asarray(Ht0, np.float32).copy()
    Wx = np.asarray(params["Wx"]); Wc = np.asarray(params["Wc"])
    bias = np.asarray(params["rnn_bias"])
    W1 = np.asarray(params["_W1"]); b1 = np.asarray(params["_b1"])
    W2 = np.asarray(params["_W2"]); b2 = np.asarray(params["_b2"])
    T = Xn.shape[0]
    preds = []
    for t in range(T):
        idx = np.nonzero(Mn[t])[0]
        x_t = Wx[idx] * Xn[t, idx][:, None] + bias[idx]
        h_t = np.einsum("fhj,fj->fh", Wc[idx], Hn[idx])
        Hn[idx] = np.tanh(x_t + h_t)
        agg = Hn[idx].mean(axis=0)
        hidden = np.maximum(agg @ W1.T + b1, 0.0)
        logits = hidden @ W2.T + b2
        e = np.exp(logits - logits.max())
        preds.append(e / e.sum())
    return np.stack(preds, axis=0), Hn


if __name__ == "__main__":
    n_features, hidden_size, n_class, seq_len = 8, 32, 4, 16

    key = jax.random.PRNGKey(0)
    kp, kx, kh, km = jax.random.split(key, 4)
    params = init_params(kp, n_features, hidden_size, n_class)
    packed = pack_params(params, n_features, hidden_size, n_class)   # built once (hoisted)
    forward = make_packet_rnn_forward(n_features, hidden_size, n_class, t_chunk=8)

    X = jax.random.normal(kx, (seq_len, n_features), jnp.float32)
    Ht0 = jax.random.normal(kh, (n_features, hidden_size), jnp.float32)
    # random 0/1 "current features" mask; keep >=1 active feature per packet
    mask = (jax.random.uniform(km, (seq_len, n_features)) > 0.4).astype(jnp.int32)
    mask = mask.at[:, 0].set(1)

    pred, ht_final = forward(X, mask, Ht0, packed)
    pred, ht_final = jax.block_until_ready((pred, ht_final))

    ref_pred, ref_ht = reference_numpy(X, mask, Ht0, params)
    # MXU default precision truncates matmul operands to bf16 (~2^-9 relative per
    # recurrence step; observed <~1e-3 over 16 steps) -> tolerances sized with ~5x margin.
    assert np.allclose(np.asarray(pred), ref_pred, atol=5e-3, rtol=5e-3), \
        float(np.abs(np.asarray(pred) - ref_pred).max())
    assert np.allclose(np.asarray(ht_final), ref_ht, atol=5e-3, rtol=5e-3), \
        float(np.abs(np.asarray(ht_final) - ref_ht).max())

    print("KERNEL_OK")
</pallas_src>

<mosaic_0001>
module attributes {stable_mosaic.version = 11 : i64} {
  func.func @head_kernel(%arg0: i32, %arg1: memref<8x32xf32, #tpu.memory_space<vmem>>, %arg2: memref<32x32xf32, #tpu.memory_space<vmem>>, %arg3: memref<1x32xf32, #tpu.memory_space<vmem>>, %arg4: memref<32x128xf32, #tpu.memory_space<vmem>>, %arg5: memref<1x128xf32, #tpu.memory_space<vmem>>, %arg6: memref<8x128xf32, #tpu.memory_space<vmem>>) attributes {dimension_semantics = [#tpu.dimension_semantics<parallel>], iteration_bounds = array<i64: 2>, scalar_prefetch = 0 : i64, scratch_operands = 0 : i64, tpu.core_type = #tpu.core_type<tc>, window_params = [{transform_indices = @transform_0, window_bounds = array<i64: 8, 32>}, {pipeline_mode = #tpu.pipeline_mode<synchronous>, transform_indices = @transform_1, window_bounds = array<i64: 32, 32>}, {pipeline_mode = #tpu.pipeline_mode<synchronous>, transform_indices = @transform_2, window_bounds = array<i64: 1, 32>}, {pipeline_mode = #tpu.pipeline_mode<synchronous>, transform_indices = @transform_3, window_bounds = array<i64: 32, 128>}, {pipeline_mode = #tpu.pipeline_mode<synchronous>, transform_indices = @transform_4, window_bounds = array<i64: 1, 128>}, {transform_indices = @transform_5, window_bounds = array<i64: 8, 128>}]} {
    %c0 = arith.constant 0 : index
    %c0_0 = arith.constant 0 : index
    %0 = vector.load %arg1[%c0, %c0_0] : memref<8x32xf32, #tpu.memory_space<vmem>>, vector<8x32xf32>
    %c0_1 = arith.constant 0 : index
    %c0_2 = arith.constant 0 : index
    %1 = vector.load %arg2[%c0_1, %c0_2] : memref<32x32xf32, #tpu.memory_space<vmem>>, vector<32x32xf32>
    %cst = arith.constant dense<0.000000e+00> : vector<8x32xf32>
    %2 = tpu.matmul %0, %1, %cst {dimension_numbers = #tpu.dot_dimension_numbers<[1], [0], [0], [1], [0, 0, 1, 1], [], []>} : vector<8x32xf32>, vector<32x32xf32>, vector<8x32xf32> -> vector<8x32xf32>
    %c0_3 = arith.constant 0 : index
    %c0_4 = arith.constant 0 : index
    %3 = vector.load %arg3[%c0_3, %c0_4] : memref<1x32xf32, #tpu.memory_space<vmem>>, vector<1x32xf32>
    %4 = vector.broadcast %3 : vector<1x32xf32> to vector<8x32xf32>
    %5 = arith.addf %2, %4 : vector<8x32xf32>
    %cst_5 = arith.constant 0.000000e+00 : f32
    %6 = vector.broadcast %cst_5 : f32 to vector<8x32xf32>
    %7 = arith.maximumf %5, %6 : vector<8x32xf32>
    %c0_6 = arith.constant 0 : index
    %c0_7 = arith.constant 0 : index
    %8 = vector.load %arg4[%c0_6, %c0_7] : memref<32x128xf32, #tpu.memory_space<vmem>>, vector<32x128xf32>
    %cst_8 = arith.constant dense<0.000000e+00> : vector<8x128xf32>
    %9 = tpu.matmul %7, %8, %cst_8 {dimension_numbers = #tpu.dot_dimension_numbers<[1], [0], [0], [1], [0, 0, 1, 1], [], []>} : vector<8x32xf32>, vector<32x128xf32>, vector<8x128xf32> -> vector<8x128xf32>
    %c0_9 = arith.constant 0 : index
    %c0_10 = arith.constant 0 : index
    %10 = vector.load %arg5[%c0_9, %c0_10] : memref<1x128xf32, #tpu.memory_space<vmem>>, vector<1x128xf32>
    %11 = vector.broadcast %10 : vector<1x128xf32> to vector<8x128xf32>
    %12 = arith.addf %9, %11 : vector<8x128xf32>
    %cst_11 = arith.constant dense<0xFF800000> : vector<8xf32>
    %13 = vector.multi_reduction <maximumf>, %12, %cst_11 [1] : vector<8x128xf32> to vector<8xf32>
    %14 = vector.shape_cast %13 : vector<8xf32> to vector<8x1xf32>
    %15 = vector.broadcast %14 : vector<8x1xf32> to vector<8x128xf32>
    %16 = arith.subf %12, %15 : vector<8x128xf32>
    %17 = math.exp %16 : vector<8x128xf32>
    %cst_12 = arith.constant dense<0.000000e+00> : vector<8xf32>
    %18 = vector.multi_reduction <add>, %17, %cst_12 [1] : vector<8x128xf32> to vector<8xf32>
    %19 = vector.shape_cast %18 : vector<8xf32> to vector<8x1xf32>
    %20 = vector.broadcast %19 : vector<8x1xf32> to vector<8x128xf32>
    %21 = arith.divf %17, %20 : vector<8x128xf32>
    %c0_13 = arith.constant 0 : index
    %c0_14 = arith.constant 0 : index
    %22 = vector.load %arg6[%c0_13, %c0_14] : memref<8x128xf32, #tpu.memory_space<vmem>>, vector<8x128xf32>
    tpu.vector_store %arg6[%c0_13, %c0_14], %21 {strides = array<i32>} : memref<8x128xf32, #tpu.memory_space<vmem>>, vector<8x128xf32>,
    return
  }
  func.func @transform_0(%arg0: i32) -> (i32, i32) {
    %c0_i32 = arith.constant 0 : i32
    %c0_i32_0 = arith.constant 0 : i32
    return %arg0, %c0_i32 : i32, i32
  }
  func.func @transform_1(%arg0: i32) -> (i32, i32) {
    %c0_i32 = arith.constant 0 : i32
    %c0_i32_0 = arith.constant 0 : i32
    %c0_i32_1 = arith.constant 0 : i32
    return %c0_i32, %c0_i32_0 : i32, i32
  }
  func.func @transform_2(%arg0: i32) -> (i32, i32) {
    %c0_i32 = arith.constant 0 : i32
    %c0_i32_0 = arith.constant 0 : i32
    %c0_i32_1 = arith.constant 0 : i32
    return %c0_i32, %c0_i32_0 : i32, i32
  }
  func.func @transform_3(%arg0: i32) -> (i32, i32) {
    %c0_i32 = arith.constant 0 : i32
    %c0_i32_0 = arith.constant 0 : i32
    %c0_i32_1 = arith.constant 0 : i32
    return %c0_i32, %c0_i32_0 : i32, i32
  }
  func.func @transform_4(%arg0: i32) -> (i32, i32) {
    %c0_i32 = arith.constant 0 : i32
    %c0_i32_0 = arith.constant 0 : i32
    %c0_i32_1 = arith.constant 0 : i32
    return %c0_i32, %c0_i32_0 : i32, i32
  }
  func.func @transform_5(%arg0: i32) -> (i32, i32) {
    %c0_i32 = arith.constant 0 : i32
    %c0_i32_0 = arith.constant 0 : i32
    return %arg0, %c0_i32 : i32, i32
  }
}

module attributes {stable_mosaic.version = 11 : i64} {
  func.func @rnn_kernel(%arg0: i32, %arg1: memref<8x8xf32, #tpu.memory_space<vmem>>, %arg2: memref<8x8xf32, #tpu.memory_space<vmem>>, %arg3: memref<1x256xf32, #tpu.memory_space<vmem>>, %arg4: memref<1x256xf32, #tpu.memory_space<vmem>>, %arg5: memref<1x256xf32, #tpu.memory_space<vmem>>, %arg6: memref<8x256xf32, #tpu.memory_space<vmem>>, %arg7: memref<256x256xf32, #tpu.memory_space<vmem>>, %arg8: memref<256x32xf32, #tpu.memory_space<vmem>>, %arg9: memref<8x32xf32, #tpu.memory_space<vmem>>, %arg10: memref<1x256xf32, #tpu.memory_space<vmem>>, %arg11: memref<1x256xf32, #tpu.memory_space<vmem>>) attributes {dimension_semantics = [#tpu.dimension_semantics<arbitrary>], iteration_bounds = array<i64: 2>, scalar_prefetch = 0 : i64, scratch_operands = 1 : i64, tpu.core_type = #tpu.core_type<tc>, window_params = [{transform_indices = @transform_0, window_bounds = array<i64: 8, 8>}, {transform_indices = @transform_1, window_bounds = array<i64: 8, 8>}, {pipeline_mode = #tpu.pipeline_mode<synchronous>, transform_indices = @transform_2, window_bounds = array<i64: 1, 256>}, {pipeline_mode = #tpu.pipeline_mode<synchronous>, transform_indices = @transform_3, window_bounds = array<i64: 1, 256>}, {pipeline_mode = #tpu.pipeline_mode<synchronous>, transform_indices = @transform_4, window_bounds = array<i64: 1, 256>}, {pipeline_mode = #tpu.pipeline_mode<synchronous>, transform_indices = @transform_5, window_bounds = array<i64: 8, 256>}, {pipeline_mode = #tpu.pipeline_mode<synchronous>, transform_indices = @transform_6, window_bounds = array<i64: 256, 256>}, {pipeline_mode = #tpu.pipeline_mode<synchronous>, transform_indices = @transform_7, window_bounds = array<i64: 256, 32>}, {transform_indices = @transform_8, window_bounds = array<i64: 8, 32>}, {pipeline_mode = #tpu.pipeline_mode<synchronous>, transform_indices = @transform_9, window_bounds = array<i64: 1, 256>}]} {
    %c0_i32 = arith.constant 0 : i32
    %0 = arith.cmpi eq, %arg0, %c0_i32 : i32
    %1 = arith.extui %0 : i1 to i32
    %c0_i32_0 = arith.constant 0 : i32
    %2 = arith.cmpi ne, %1, %c0_i32_0 : i32
    scf.if %2 {
      %c0_70 = arith.constant 0 : index
      %c0_71 = arith.constant 0 : index
      %191 = vector.load %arg3[%c0_70, %c0_71] : memref<1x256xf32, #tpu.memory_space<vmem>>, vector<1x256xf32>
      %c0_72 = arith.constant 0 : index
      %c0_73 = arith.constant 0 : index
      %192 = vector.load %arg11[%c0_72, %c0_73] : memref<1x256xf32, #tpu.memory_space<vmem>>, vector<1x256xf32>
      tpu.vector_store %arg11[%c0_72, %c0_73], %191 {strides = array<i32>} : memref<1x256xf32, #tpu.memory_space<vmem>>, vector<1x256xf32>,
    } else {
    }
    %c0 = arith.constant 0 : index
    %c0_1 = arith.constant 0 : index
    %3 = vector.load %arg1[%c0, %c0_1] : memref<8x8xf32, #tpu.memory_space<vmem>>, vector<8x8xf32>
    %c0_2 = arith.constant 0 : index
    %c0_3 = arith.constant 0 : index
    %4 = vector.load %arg2[%c0_2, %c0_3] : memref<8x8xf32, #tpu.memory_space<vmem>>, vector<8x8xf32>
    %c0_4 = arith.constant 0 : index
    %c0_5 = arith.constant 0 : index
    %5 = vector.load %arg6[%c0_4, %c0_5] : memref<8x256xf32, #tpu.memory_space<vmem>>, vector<8x256xf32>
    %6 = arith.truncf %3 : vector<8x8xf32> to vector<8x8xbf16>
    %7 = arith.extf %6 : vector<8x8xbf16> to vector<8x8xf32>
    %8 = arith.subf %3, %7 : vector<8x8xf32>
    %cst = arith.constant dense<0.000000e+00> : vector<8x256xf32>
    %9 = tpu.matmul %7, %5, %cst {dimension_numbers = #tpu.dot_dimension_numbers<[1], [0], [0], [1], [0, 0, 1, 1], [], []>} : vector<8x8xf32>, vector<8x256xf32>, vector<8x256xf32> -> vector<8x256xf32>
    %cst_6 = arith.constant dense<0.000000e+00> : vector<8x256xf32>
    %10 = tpu.matmul %8, %5, %cst_6 {dimension_numbers = #tpu.dot_dimension_numbers<[1], [0], [0], [1], [0, 0, 1, 1], [], []>} : vector<8x8xf32>, vector<8x256xf32>, vector<8x256xf32> -> vector<8x256xf32>
    %11 = arith.addf %9, %10 : vector<8x256xf32>
    %cst_7 = arith.constant dense<0.000000e+00> : vector<8x256xf32>
    %12 = tpu.matmul %4, %5, %cst_7 {dimension_numbers = #tpu.dot_dimension_numbers<[1], [0], [0], [1], [0, 0, 1, 1], [], []>} : vector<8x8xf32>, vector<8x256xf32>, vector<8x256xf32> -> vector<8x256xf32>
    %c0_8 = arith.constant 0 : index
    %c0_9 = arith.constant 0 : index
    %13 = vector.load %arg4[%c0_8, %c0_9] : memref<1x256xf32, #tpu.memory_space<vmem>>, vector<1x256xf32>
    %14 = vector.broadcast %13 : vector<1x256xf32> to vector<8x256xf32>
    %15 = arith.mulf %14, %11 : vector<8x256xf32>
    %c0_10 = arith.constant 0 : index
    %c0_11 = arith.constant 0 : index
    %16 = vector.load %arg5[%c0_10, %c0_11] : memref<1x256xf32, #tpu.memory_space<vmem>>, vector<1x256xf32>
    %17 = vector.broadcast %16 : vector<1x256xf32> to vector<8x256xf32>
    %18 = arith.addf %15, %17 : vector<8x256xf32>
    %19 = tpu.iota {dimensions = array<i32: 0>} : vector<8x1xi32>
    %c0_12 = arith.constant 0 : index
    %c0_13 = arith.constant 0 : index
    %20 = vector.load %arg11[%c0_12, %c0_13] : memref<1x256xf32, #tpu.memory_space<vmem>>, vector<1x256xf32>
    %cst_14 = arith.constant 0.000000e+00 : f32
    %21 = vector.broadcast %cst_14 : f32 to vector<8x256xf32>
    %c0_15 = arith.constant 0 : index
    %c0_16 = arith.constant 0 : index
    %22 = vector.load %arg7[%c0_15, %c0_16] : memref<256x256xf32, #tpu.memory_space<vmem>>, vector<256x256xf32>
    %cst_17 = arith.constant dense<0.000000e+00> : vector<1x256xf32>
    %23 = tpu.matmul %20, %22, %cst_17 {dimension_numbers = #tpu.dot_dimension_numbers<[1], [0], [0], [1], [0, 0, 1, 1], [], []>} : vector<1x256xf32>, vector<256x256xf32>, vector<1x256xf32> -> vector<1x256xf32>
    %24 = vector.extract_strided_slice %18 {offsets = [0, 0], sizes = [1, 256], strides = [1, 1]} : vector<8x256xf32> to vector<1x256xf32>
    %25 = arith.addf %24, %23 : vector<1x256xf32>
    %26 = math.tanh %25 : vector<1x256xf32>
    %27 = vector.extract_strided_slice %12 {offsets = [0, 0], sizes = [1, 256], strides = [1, 1]} : vector<8x256xf32> to vector<1x256xf32>
    %cst_18 = arith.constant 0.000000e+00 : f32
    %28 = vector.broadcast %cst_18 : f32 to vector<1x256xf32>
    %29 = arith.cmpf ogt, %27, %28 : vector<1x256xf32>
    %30 = arith.select %29, %26, %20 : vector<1x256xi1>, vector<1x256xf32>
    %c0_i32_19 = arith.constant 0 : i32
    %31 = vector.broadcast %c0_i32_19 : i32 to vector<8x1xi32>
    %32 = arith.cmpi eq, %19, %31 : vector<8x1xi32>
    %33 = arith.mulf %27, %30 : vector<1x256xf32>
    %cst_20 = arith.constant 0.000000e+00 : f32
    %34 = vector.shape_cast %32 : vector<8x1xi1> to vector<8x1xi1>
    %35 = vector.broadcast %34 : vector<8x1xi1> to vector<8x256xi1>
    %36 = vector.shape_cast %33 : vector<1x256xf32> to vector<1x256xf32>
    %37 = vector.broadcast %36 : vector<1x256xf32> to vector<8x256xf32>
    %38 = vector.broadcast %cst_20 : f32 to vector<8x256xf32>
    %39 = arith.select %35, %37, %38 : vector<8x256xi1>, vector<8x256xf32>
    %40 = arith.addf %21, %39 : vector<8x256xf32>
    %c0_21 = arith.constant 0 : index
    %c0_22 = arith.constant 0 : index
    %41 = vector.load %arg7[%c0_21, %c0_22] : memref<256x256xf32, #tpu.memory_space<vmem>>, vector<256x256xf32>
    %cst_23 = arith.constant dense<0.000000e+00> : vector<1x256xf32>
    %42 = tpu.matmul %30, %41, %cst_23 {dimension_numbers = #tpu.dot_dimension_numbers<[1], [0], [0], [1], [0, 0, 1, 1], [], []>} : vector<1x256xf32>, vector<256x256xf32>, vector<1x256xf32> -> vector<1x256xf32>
    %43 = vector.extract_strided_slice %18 {offsets = [1, 0], sizes = [1, 256], strides = [1, 1]} : vector<8x256xf32> to vector<1x256xf32>
    %44 = arith.addf %43, %42 : vector<1x256xf32>
    %45 = math.tanh %44 : vector<1x256xf32>
    %46 = vector.extract_strided_slice %12 {offsets = [1, 0], sizes = [1, 256], strides = [1, 1]} : vector<8x256xf32> to vector<1x256xf32>
    %cst_24 = arith.constant 0.000000e+00 : f32
    %47 = vector.broadcast %cst_24 : f32 to vector<1x256xf32>
    %48 = arith.cmpf ogt, %46, %47 : vector<1x256xf32>
    %49 = arith.select %48, %45, %30 : vector<1x256xi1>, vector<1x256xf32>
    %c1_i32 = arith.constant 1 : i32
    %50 = vector.broadcast %c1_i32 : i32 to vector<8x1xi32>
    %51 = arith.cmpi eq, %19, %50 : vector<8x1xi32>
    %52 = arith.mulf %46, %49 : vector<1x256xf32>
    %cst_25 = arith.constant 0.000000e+00 : f32
    %53 = vector.shape_cast %51 : vector<8x1xi1> to vector<8x1xi1>
    %54 = vector.broadcast %53 : vector<8x1xi1> to vector<8x256xi1>
    %55 = vector.shape_cast %52 : vector<1x256xf32> to vector<1x256xf32>
    %56 = vector.broadcast %55 : vector<1x256xf32> to vector<8x256xf32>
    %57 = vector.broadcast %cst_25 : f32 to vector<8x256xf32>
    %58 = arith.select %54, %56, %57 : vector<8x256xi1>, vector<8x256xf32>
    %59 = arith.addf %40, %58 : vector<8x256xf32>
    %c0_26 = arith.constant 0 : index
    %c0_27 = arith.constant 0 : index
    %60 = vector.load %arg7[%c0_26, %c0_27] : memref<256x256xf32, #tpu.memory_space<vmem>>, vector<256x256xf32>
    %cst_28 = arith.constant dense<0.000000e+00> : vector<1x256xf32>
    %61 = tpu.matmul %49, %60, %cst_28 {dimension_numbers = #tpu.dot_dimension_numbers<[1], [0], [0], [1], [0, 0, 1, 1], [], []>} : vector<1x256xf32>, vector<256x256xf32>, vector<1x256xf32> -> vector<1x256xf32>
    %62 = vector.extract_strided_slice %18 {offsets = [2, 0], sizes = [1, 256], strides = [1, 1]} : vector<8x256xf32> to vector<1x256xf32>
    %63 = arith.addf %62, %61 : vector<1x256xf32>
    %64 = math.tanh %63 : vector<1x256xf32>
    %65 = vector.extract_strided_slice %12 {offsets = [2, 0], sizes = [1, 256], strides = [1, 1]} : vector<8x256xf32> to vector<1x256xf32>
    %cst_29 = arith.constant 0.000000e+00 : f32
    %66 = vector.broadcast %cst_29 : f32 to vector<1x256xf32>
    %67 = arith.cmpf ogt, %65, %66 : vector<1x256xf32>
    %68 = arith.select %67, %64, %49 : vector<1x256xi1>, vector<1x256xf32>
    %c2_i32 = arith.constant 2 : i32
    %69 = vector.broadcast %c2_i32 : i32 to vector<8x1xi32>
    %70 = arith.cmpi eq, %19, %69 : vector<8x1xi32>
    %71 = arith.mulf %65, %68 : vector<1x256xf32>
    %cst_30 = arith.constant 0.000000e+00 : f32
    %72 = vector.shape_cast %70 : vector<8x1xi1> to vector<8x1xi1>
    %73 = vector.broadcast %72 : vector<8x1xi1> to vector<8x256xi1>
    %74 = vector.shape_cast %71 : vector<1x256xf32> to vector<1x256xf32>
    %75 = vector.broadcast %74 : vector<1x256xf32> to vector<8x256xf32>
    %76 = vector.broadcast %cst_30 : f32 to vector<8x256xf32>
    %77 = arith.select %73, %75, %76 : vector<8x256xi1>, vector<8x256xf32>
    %78 = arith.addf %59, %77 : vector<8x256xf32>
    %c0_31 = arith.constant 0 : index
    %c0_32 = arith.constant 0 : index
    %79 = vector.load %arg7[%c0_31, %c0_32] : memref<256x256xf32, #tpu.memory_space<vmem>>, vector<256x256xf32>
    %cst_33 = arith.constant dense<0.000000e+00> : vector<1x256xf32>
    %80 = tpu.matmul %68, %79, %cst_33 {dimension_numbers = #tpu.dot_dimension_numbers<[1], [0], [0], [1], [0, 0, 1, 1], [], []>} : vector<1x256xf32>, vector<256x256xf32>, vector<1x256xf32> -> vector<1x256xf32>
    %81 = vector.extract_strided_slice %18 {offsets = [3, 0], sizes = [1, 256], strides = [1, 1]} : vector<8x256xf32> to vector<1x256xf32>
    %82 = arith.addf %81, %80 : vector<1x256xf32>
    %83 = math.tanh %82 : vector<1x256xf32>
    %84 = vector.extract_strided_slice %12 {offsets = [3, 0], sizes = [1, 256], strides = [1, 1]} : vector<8x256xf32> to vector<1x256xf32>
    %cst_34 = arith.constant 0.000000e+00 : f32
    %85 = vector.broadcast %cst_34 : f32 to vector<1x256xf32>
    %86 = arith.cmpf ogt, %84, %85 : vector<1x256xf32>
    %87 = arith.select %86, %83, %68 : vector<1x256xi1>, vector<1x256xf32>
    %c3_i32 = arith.constant 3 : i32
    %88 = vector.broadcast %c3_i32 : i32 to vector<8x1xi32>
    %89 = arith.cmpi eq, %19, %88 : vector<8x1xi32>
    %90 = arith.mulf %84, %87 : vector<1x256xf32>
    %cst_35 = arith.constant 0.000000e+00 : f32
    %91 = vector.shape_cast %89 : vector<8x1xi1> to vector<8x1xi1>
    %92 = vector.broadcast %91 : vector<8x1xi1> to vector<8x256xi1>
    %93 = vector.shape_cast %90 : vector<1x256xf32> to vector<1x256xf32>
    %94 = vector.broadcast %93 : vector<1x256xf32> to vector<8x256xf32>
    %95 = vector.broadcast %cst_35 : f32 to vector<8x256xf32>
    %96 = arith.select %92, %94, %95 : vector<8x256xi1>, vector<8x256xf32>
    %97 = arith.addf %78, %96 : vector<8x256xf32>
    %c0_36 = arith.constant 0 : index
    %c0_37 = arith.constant 0 : index
    %98 = vector.load %arg7[%c0_36, %c0_37] : memref<256x256xf32, #tpu.memory_space<vmem>>, vector<256x256xf32>
    %cst_38 = arith.constant dense<0.000000e+00> : vector<1x256xf32>
    %99 = tpu.matmul %87, %98, %cst_38 {dimension_numbers = #tpu.dot_dimension_numbers<[1], [0], [0], [1], [0, 0, 1, 1], [], []>} : vector<1x256xf32>, vector<256x256xf32>, vector<1x256xf32> -> vector<1x256xf32>
    %100 = vector.extract_strided_slice %18 {offsets = [4, 0], sizes = [1, 256], strides = [1, 1]} : vector<8x256xf32> to vector<1x256xf32>
    %101 = arith.addf %100, %99 : vector<1x256xf32>
    %102 = math.tanh %101 : vector<1x256xf32>
    %103 = vector.extract_strided_slice %12 {offsets = [4, 0], sizes = [1, 256], strides = [1, 1]} : vector<8x256xf32> to vector<1x256xf32>
    %cst_39 = arith.constant 0.000000e+00 : f32
    %104 = vector.broadcast %cst_39 : f32 to vector<1x256xf32>
    %105 = arith.cmpf ogt, %103, %104 : vector<1x256xf32>
    %106 = arith.select %105, %102, %87 : vector<1x256xi1>, vector<1x256xf32>
    %c4_i32 = arith.constant 4 : i32
    %107 = vector.broadcast %c4_i32 : i32 to vector<8x1xi32>
    %108 = arith.cmpi eq, %19, %107 : vector<8x1xi32>
    %109 = arith.mulf %103, %106 : vector<1x256xf32>
    %cst_40 = arith.constant 0.000000e+00 : f32
    %110 = vector.shape_cast %108 : vector<8x1xi1> to vector<8x1xi1>
    %111 = vector.broadcast %110 : vector<8x1xi1> to vector<8x256xi1>
    %112 = vector.shape_cast %109 : vector<1x256xf32> to vector<1x256xf32>
    %113 = vector.broadcast %112 : vector<1x256xf32> to vector<8x256xf32>
    %114 = vector.broadcast %cst_40 : f32 to vector<8x256xf32>
    %115 = arith.select %111, %113, %114 : vector<8x256xi1>, vector<8x256xf32>
    %116 = arith.addf %97, %115 : vector<8x256xf32>
    %c0_41 = arith.constant 0 : index
    %c0_42 = arith.constant 0 : index
    %117 = vector.load %arg7[%c0_41, %c0_42] : memref<256x256xf32, #tpu.memory_space<vmem>>, vector<256x256xf32>
    %cst_43 = arith.constant dense<0.000000e+00> : vector<1x256xf32>
    %118 = tpu.matmul %106, %117, %cst_43 {dimension_numbers = #tpu.dot_dimension_numbers<[1], [0], [0], [1], [0, 0, 1, 1], [], []>} : vector<1x256xf32>, vector<256x256xf32>, vector<1x256xf32> -> vector<1x256xf32>
    %119 = vector.extract_strided_slice %18 {offsets = [5, 0], sizes = [1, 256], strides = [1, 1]} : vector<8x256xf32> to vector<1x256xf32>
    %120 = arith.addf %119, %118 : vector<1x256xf32>
    %121 = math.tanh %120 : vector<1x256xf32>
    %122 = vector.extract_strided_slice %12 {offsets = [5, 0], sizes = [1, 256], strides = [1, 1]} : vector<8x256xf32> to vector<1x256xf32>
    %cst_44 = arith.constant 0.000000e+00 : f32
    %123 = vector.broadcast %cst_44 : f32 to vector<1x256xf32>
    %124 = arith.cmpf ogt, %122, %123 : vector<1x256xf32>
    %125 = arith.select %124, %121, %106 : vector<1x256xi1>, vector<1x256xf32>
    %c5_i32 = arith.constant 5 : i32
    %126 = vector.broadcast %c5_i32 : i32 to vector<8x1xi32>
    %127 = arith.cmpi eq, %19, %126 : vector<8x1xi32>
    %128 = arith.mulf %122, %125 : vector<1x256xf32>
    %cst_45 = arith.constant 0.000000e+00 : f32
    %129 = vector.shape_cast %127 : vector<8x1xi1> to vector<8x1xi1>
    %130 = vector.broadcast %129 : vector<8x1xi1> to vector<8x256xi1>
    %131 = vector.shape_cast %128 : vector<1x256xf32> to vector<1x256xf32>
    %132 = vector.broadcast %131 : vector<1x256xf32> to vector<8x256xf32>
    %133 = vector.broadcast %cst_45 : f32 to vector<8x256xf32>
    %134 = arith.select %130, %132, %133 : vector<8x256xi1>, vector<8x256xf32>
    %135 = arith.addf %116, %134 : vector<8x256xf32>
    %c0_46 = arith.constant 0 : index
    %c0_47 = arith.constant 0 : index
    %136 = vector.load %arg7[%c0_46, %c0_47] : memref<256x256xf32, #tpu.memory_space<vmem>>, vector<256x256xf32>
    %cst_48 = arith.constant dense<0.000000e+00> : vector<1x256xf32>
    %137 = tpu.matmul %125, %136, %cst_48 {dimension_numbers = #tpu.dot_dimension_numbers<[1], [0], [0], [1], [0, 0, 1, 1], [], []>} : vector<1x256xf32>, vector<256x256xf32>, vector<1x256xf32> -> vector<1x256xf32>
    %138 = vector.extract_strided_slice %18 {offsets = [6, 0], sizes = [1, 256], strides = [1, 1]} : vector<8x256xf32> to vector<1x256xf32>
    %139 = arith.addf %138, %137 : vector<1x256xf32>
    %140 = math.tanh %139 : vector<1x256xf32>
    %141 = vector.extract_strided_slice %12 {offsets = [6, 0], sizes = [1, 256], strides = [1, 1]} : vector<8x256xf32> to vector<1x256xf32>
    %cst_49 = arith.constant 0.000000e+00 : f32
    %142 = vector.broadcast %cst_49 : f32 to vector<1x256xf32>
    %143 = arith.cmpf ogt, %141, %142 : vector<1x256xf32>
    %144 = arith.select %143, %140, %125 : vector<1x256xi1>, vector<1x256xf32>
    %c6_i32 = arith.constant 6 : i32
    %145 = vector.broadcast %c6_i32 : i32 to vector<8x1xi32>
    %146 = arith.cmpi eq, %19, %145 : vector<8x1xi32>
    %147 = arith.mulf %141, %144 : vector<1x256xf32>
    %cst_50 = arith.constant 0.000000e+00 : f32
    %148 = vector.shape_cast %146 : vector<8x1xi1> to vector<8x1xi1>
    %149 = vector.broadcast %148 : vector<8x1xi1> to vector<8x256xi1>
    %150 = vector.shape_cast %147 : vector<1x256xf32> to vector<1x256xf32>
    %151 = vector.broadcast %150 : vector<1x256xf32> to vector<8x256xf32>
    %152 = vector.broadcast %cst_50 : f32 to vector<8x256xf32>
    %153 = arith.select %149, %151, %152 : vector<8x256xi1>, vector<8x256xf32>
    %154 = arith.addf %135, %153 : vector<8x256xf32>
    %c0_51 = arith.constant 0 : index
    %c0_52 = arith.constant 0 : index
    %155 = vector.load %arg7[%c0_51, %c0_52] : memref<256x256xf32, #tpu.memory_space<vmem>>, vector<256x256xf32>
    %cst_53 = arith.constant dense<0.000000e+00> : vector<1x256xf32>
    %156 = tpu.matmul %144, %155, %cst_53 {dimension_numbers = #tpu.dot_dimension_numbers<[1], [0], [0], [1], [0, 0, 1, 1], [], []>} : vector<1x256xf32>, vector<256x256xf32>, vector<1x256xf32> -> vector<1x256xf32>
    %157 = vector.extract_strided_slice %18 {offsets = [7, 0], sizes = [1, 256], strides = [1, 1]} : vector<8x256xf32> to vector<1x256xf32>
    %158 = arith.addf %157, %156 : vector<1x256xf32>
    %159 = math.tanh %158 : vector<1x256xf32>
    %160 = vector.extract_strided_slice %12 {offsets = [7, 0], sizes = [1, 256], strides = [1, 1]} : vector<8x256xf32> to vector<1x256xf32>
    %cst_54 = arith.constant 0.000000e+00 : f32
    %161 = vector.broadcast %cst_54 : f32 to vector<1x256xf32>
    %162 = arith.cmpf ogt, %160, %161 : vector<1x256xf32>
    %163 = arith.select %162, %159, %144 : vector<1x256xi1>, vector<1x256xf32>
    %c7_i32 = arith.constant 7 : i32
    %164 = vector.broadcast %c7_i32 : i32 to vector<8x1xi32>
    %165 = arith.cmpi eq, %19, %164 : vector<8x1xi32>
    %166 = arith.mulf %160, %163 : vector<1x256xf32>
    %cst_55 = arith.constant 0.000000e+00 : f32
    %167 = vector.shape_cast %165 : vector<8x1xi1> to vector<8x1xi1>
    %168 = vector.broadcast %167 : vector<8x1xi1> to vector<8x256xi1>
    %169 = vector.shape_cast %166 : vector<1x256xf32> to vector<1x256xf32>
    %170 = vector.broadcast %169 : vector<1x256xf32> to vector<8x256xf32>
    %171 = vector.broadcast %cst_55 : f32 to vector<8x256xf32>
    %172 = arith.select %168, %170, %171 : vector<8x256xi1>, vector<8x256xf32>
    %173 = arith.addf %154, %172 : vector<8x256xf32>
    %c0_56 = arith.constant 0 : index
    %c0_57 = arith.constant 0 : index
    %174 = vector.load %arg11[%c0_56, %c0_57] : memref<1x256xf32, #tpu.memory_space<vmem>>, vector<1x256xf32>
    tpu.vector_store %arg11[%c0_56, %c0_57], %163 {strides = array<i32>} : memref<1x256xf32, #tpu.memory_space<vmem>>, vector<1x256xf32>,
    %c0_58 = arith.constant 0 : index
    %c0_59 = arith.constant 0 : index
    %175 = vector.load %arg10[%c0_58, %c0_59] : memref<1x256xf32, #tpu.memory_space<vmem>>, vector<1x256xf32>
    tpu.vector_store %arg10[%c0_58, %c0_59], %163 {strides = array<i32>} : memref<1x256xf32, #tpu.memory_space<vmem>>, vector<1x256xf32>,
    %176 = arith.truncf %173 : vector<8x256xf32> to vector<8x256xbf16>
    %177 = arith.extf %176 : vector<8x256xbf16> to vector<8x256xf32>
    %178 = arith.subf %173, %177 : vector<8x256xf32>
    %c0_60 = arith.constant 0 : index
    %c0_61 = arith.constant 0 : index
    %179 = vector.load %arg8[%c0_60, %c0_61] : memref<256x32xf32, #tpu.memory_space<vmem>>, vector<256x32xf32>
    %cst_62 = arith.constant dense<0.000000e+00> : vector<8x32xf32>
    %180 = tpu.matmul %177, %179, %cst_62 {dimension_numbers = #tpu.dot_dimension_numbers<[1], [0], [0], [1], [0, 0, 1, 1], [], []>} : vector<8x256xf32>, vector<256x32xf32>, vector<8x32xf32> -> vector<8x32xf32>
    %c0_63 = arith.constant 0 : index
    %c0_64 = arith.constant 0 : index
    %181 = vector.load %arg8[%c0_63, %c0_64] : memref<256x32xf32, #tpu.memory_space<vmem>>, vector<256x32xf32>
    %cst_65 = arith.constant dense<0.000000e+00> : vector<8x32xf32>
    %182 = tpu.matmul %178, %181, %cst_65 {dimension_numbers = #tpu.dot_dimension_numbers<[1], [0], [0], [1], [0, 0, 1, 1], [], []>} : vector<8x256xf32>, vector<256x32xf32>, vector<8x32xf32> -> vector<8x32xf32>
    %183 = arith.addf %180, %182 : vector<8x32xf32>
    %cst_66 = arith.constant dense<0.000000e+00> : vector<8xf32>
    %184 = vector.multi_reduction <add>, %4, %cst_66 [1] : vector<8x8xf32> to vector<8xf32>
    %185 = vector.shape_cast %184 : vector<8xf32> to vector<8x1xf32>
    %cst_67 = arith.constant 1.000000e+00 : f32
    %186 = vector.broadcast %cst_67 : f32 to vector<8x1xf32>
    %187 = arith.maximumf %185, %186 : vector<8x1xf32>
    %188 = vector.broadcast %187 : vector<8x1xf32> to vector<8x32xf32>
    %189 = arith.divf %183, %188 : vector<8x32xf32>
    %c0_68 = arith.constant 0 : index
    %c0_69 = arith.constant 0 : index
    %190 = vector.load %arg9[%c0_68, %c0_69] : memref<8x32xf32, #tpu.memory_space<vmem>>, vector<8x32xf32>
    tpu.vector_store %arg9[%c0_68, %c0_69], %189 {strides = array<i32>} : memref<8x32xf32, #tpu.memory_space<vmem>>, vector<8x32xf32>,
    return
  }
  func.func @transform_0(%arg0: i32) -> (i32, i32) {
    %c0_i32 = arith.constant 0 : i32
    %c0_i32_0 = arith.constant 0 : i32
    return %arg0, %c0_i32 : i32, i32
  }
  func.func @transform_1(%arg0: i32) -> (i32, i32) {
    %c0_i32 = arith.constant 0 : i32
    %c0_i32_0 = arith.constant 0 : i32
    return %arg0, %c0_i32 : i32, i32
  }
  func.func @transform_2(%arg0: i32) -> (i32, i32) {
    %c0_i32 = arith.constant 0 : i32
    %c0_i32_0 = arith.constant 0 : i32
    %c0_i32_1 = arith.constant 0 : i32
    return %c0_i32, %c0_i32_0 : i32, i32
  }
  func.func @transform_3(%arg0: i32) -> (i32, i32) {
    %c0_i32 = arith.constant 0 : i32
    %c0_i32_0 = arith.constant 0 : i32
    %c0_i32_1 = arith.constant 0 : i32
    return %c0_i32, %c0_i32_0 : i32, i32
  }
  func.func @transform_4(%arg0: i32) -> (i32, i32) {
    %c0_i32 = arith.constant 0 : i32
    %c0_i32_0 = arith.constant 0 : i32
    %c0_i32_1 = arith.constant 0 : i32
    return %c0_i32, %c0_i32_0 : i32, i32
  }
  func.func @transform_5(%arg0: i32) -> (i32, i32) {
    %c0_i32 = arith.constant 0 : i32
    %c0_i32_0 = arith.constant 0 : i32
    %c0_i32_1 = arith.constant 0 : i32
    return %c0_i32, %c0_i32_0 : i32, i32
  }
  func.func @transform_6(%arg0: i32) -> (i32, i32) {
    %c0_i32 = arith.constant 0 : i32
    %c0_i32_0 = arith.constant 0 : i32
    %c0_i32_1 = arith.constant 0 : i32
    return %c0_i32, %c0_i32_0 : i32, i32
  }
  func.func @transform_7(%arg0: i32) -> (i32, i32) {
    %c0_i32 = arith.constant 0 : i32
    %c0_i32_0 = arith.constant 0 : i32
    %c0_i32_1 = arith.constant 0 : i32
    return %c0_i32, %c0_i32_0 : i32, i32
  }
  func.func @transform_8(%arg0: i32) -> (i32, i32) {
    %c0_i32 = arith.constant 0 : i32
    %c0_i32_0 = arith.constant 0 : i32
    return %arg0, %c0_i32 : i32, i32
  }
  func.func @transform_9(%arg0: i32) -> (i32, i32) {
    %c0_i32 = arith.constant 0 : i32
    %c0_i32_0 = arith.constant 0 : i32
    %c0_i32_1 = arith.constant 0 : i32
    return %c0_i32, %c0_i32_0 : i32, i32
  }
}

</mosaic_0001>

<llo_original>
// kernel: forward.3
$region0: #{forward.3}
  #allocation0 [shape = 'u32[]', space=smem, size = 0x4, offset = 0x4, fixed_abs, tag = 'smem constant byte address 0x4 - core index']
  #allocation1 [shape = 'u32[144,128]{1,0:T(1,128)}', space=vmem, size = 0x12000, scoped, tag = 'internal scratch']
  %s0 = inlined_call_operand.vmem [shape: f32[16,32], index: 0, kind: input, shape index: {}]
  %s1 = inlined_call_operand.vmem [shape: f32[32,32], index: 1, kind: input, shape index: {}]
  %s2 = inlined_call_operand.vmem [shape: f32[1,32], index: 2, kind: input, shape index: {}]
  %s3 = inlined_call_operand.vmem [shape: f32[32,128], index: 3, kind: input, shape index: {}]
  %s4 = inlined_call_operand.vmem [shape: f32[1,128], index: 4, kind: input, shape index: {}]
  %s5 = inlined_call_operand.vmem [shape: f32[16,128], index: 5, kind: output, shape index: {}]
  %s6 = sld [smem:[#allocation0]]
  $region53: #{forward.3} parent=0
    _
  %s8 = ssub.s32 1, %s6
  %s9 = scalar_select 0, %s8, %s6
  loop: start=0, step=1, limit=4
  $region2: #{forward.3} parent=0 // loop_pre_header
    _
  $region3: #{forward.3} parent=0 // loop_header
    %s11 = sphi 0, %s15
    %p12 = scmp.ge.s32.totalorder %s11, 4
    %s21 = sphi 0, %s23
    %s24 = sphi 0, %s21
    %s25 = sphi 0, %s24
    %s41 = sphi 0, %s25
    %s45 = sphi 0, %s45
    %s47 = sphi 0, %s45
    %s48 = sphi 0, %s47
    %s62 = sphi 0, %s48
    %s66 = sphi 0, %s66
    %s68 = sphi 0, %s66
    %s69 = sphi 0, %s68
    %s83 = sphi 0, %s69
    %s87 = sphi 0, %s87
    %s89 = sphi 0, %s87
    %s90 = sphi 0, %s89
    %s104 = sphi 0, %s90
    %s108 = sphi 0, %s108
    %s110 = sphi 0, %s108
    %s111 = sphi 0, %s110
    %s125 = sphi 0, %s111
    %s131 = sphi 0, %s133
    %s134 = sphi 0, %s131
    %s135 = sphi 0, %s134
    %s151 = sphi 0, %s135
  $region4: #{forward.3} parent=0 // loop_header_branch
    %14 = sbr.rel (%p12) target = $region8
  $region5: #{forward.3} parent=0 // loop_body
    %s16 = ssub.s32 %s11, 1
    %s17 = ssub.s32 %s11, 2
    %s18 = sadd.s32 %s11, 1
    %s19 = ssub.s32 %s11, %s18
    %p20 = scmp.eq.s32.totalorder %s19, 0
    %s22 = sadd.s32 %s21, 1
    %s23 = scalar_select %p20, %s21, %s22
    %p26 = pneg %p20
    %p27 = scmp.eq.s32.totalorder %s11, 1
    %p28 = por %p26, %p27
    %p29 = scmp.ne.s32.totalorder %s21, %s24
    %p30 = scmp.eq.s32.totalorder %s11, 0
    %p31 = por %p29, %p30
    %p32 = scmp.ne.s32.totalorder %s21, %s24
    %p33 = scmp.eq.s32.totalorder %s16, 1
    %p34 = por %p32, %p33
    %p35 = scmp.ne.s32.totalorder %s24, %s25
    %p36 = scmp.eq.s32.totalorder %s16, 0
    %p37 = por %p35, %p36
    %p38 = scmp.ne.s32.totalorder %s24, %s25
    %p39 = scmp.eq.s32.totalorder %s17, 1
    %p40 = por %p38, %p39
    %p42 = scmp.ne.s32.totalorder %s25, %s41
    %p43 = scmp.eq.s32.totalorder %s17, 0
    %p44 = por %p42, %p43
    %s46 = sadd.s32 %s45, 1
    %p49 = scmp.eq.s32.totalorder %s11, 1
    %p50 = scmp.ne.s32.totalorder %s45, %s47
    %p51 = scmp.eq.s32.totalorder %s11, 0
    %p52 = por %p50, %p51
    %p53 = scmp.ne.s32.totalorder %s45, %s47
    %p54 = scmp.eq.s32.totalorder %s16, 1
    %p55 = por %p53, %p54
    %p56 = scmp.ne.s32.totalorder %s47, %s48
    %p57 = scmp.eq.s32.totalorder %s16, 0
    %p58 = por %p56, %p57
    %p59 = scmp.ne.s32.totalorder %s47, %s48
    %p60 = scmp.eq.s32.totalorder %s17, 1
    %p61 = por %p59, %p60
    %p63 = scmp.ne.s32.totalorder %s48, %s62
    %p64 = scmp.eq.s32.totalorder %s17, 0
    %p65 = por %p63, %p64
    %s67 = sadd.s32 %s66, 1
    %p70 = scmp.eq.s32.totalorder %s11, 1
    %p71 = scmp.ne.s32.totalorder %s66, %s68
    %p72 = scmp.eq.s32.totalorder %s11, 0
    %p73 = por %p71, %p72
    %p74 = scmp.ne.s32.totalorder %s66, %s68
    %p75 = scmp.eq.s32.totalorder %s16, 1
    %p76 = por %p74, %p75
    %p77 = scmp.ne.s32.totalorder %s68, %s69
    %p78 = scmp.eq.s32.totalorder %s16, 0
    %p79 = por %p77, %p78
    %p80 = scmp.ne.s32.totalorder %s68, %s69
    %p81 = scmp.eq.s32.totalorder %s17, 1
    %p82 = por %p80, %p81
    %p84 = scmp.ne.s32.totalorder %s69, %s83
    %p85 = scmp.eq.s32.totalorder %s17, 0
    %p86 = por %p84, %p85
    %s88 = sadd.s32 %s87, 1
    %p91 = scmp.eq.s32.totalorder %s11, 1
    %p92 = scmp.ne.s32.totalorder %s87, %s89
    %p93 = scmp.eq.s32.totalorder %s11, 0
    %p94 = por %p92, %p93
    %p95 = scmp.ne.s32.totalorder %s87, %s89
    %p96 = scmp.eq.s32.totalorder %s16, 1
    %p97 = por %p95, %p96
    %p98 = scmp.ne.s32.totalorder %s89, %s90
    %p99 = scmp.eq.s32.totalorder %s16, 0
    %p100 = por %p98, %p99
    %p101 = scmp.ne.s32.totalorder %s89, %s90
    %p102 = scmp.eq.s32.totalorder %s17, 1
    %p103 = por %p101, %p102
    %p105 = scmp.ne.s32.totalorder %s90, %s104
    %p106 = scmp.eq.s32.totalorder %s17, 0
    %p107 = por %p105, %p106
    %s109 = sadd.s32 %s108, 1
    %p112 = scmp.eq.s32.totalorder %s11, 1
    %p113 = scmp.ne.s32.totalorder %s108, %s110
    %p114 = scmp.eq.s32.totalorder %s11, 0
    %p115 = por %p113, %p114
    %p116 = scmp.ne.s32.totalorder %s108, %s110
    %p117 = scmp.eq.s32.totalorder %s16, 1
    %p118 = por %p116, %p117
    %p119 = scmp.ne.s32.totalorder %s110, %s111
    %p120 = scmp.eq.s32.totalorder %s16, 0
    %p121 = por %p119, %p120
    %p122 = scmp.ne.s32.totalorder %s110, %s111
    %p123 = scmp.eq.s32.totalorder %s17, 1
    %p124 = por %p122, %p123
    %p126 = scmp.ne.s32.totalorder %s111, %s125
    %p127 = scmp.eq.s32.totalorder %s17, 0
    %p128 = por %p126, %p127
    %s129 = ssub.s32 %s11, %s18
    %p130 = scmp.eq.s32.totalorder %s129, 0
    %s132 = sadd.s32 %s131, 1
    %s133 = scalar_select %p130, %s131, %s132
    %p136 = pneg %p130
    %p137 = scmp.eq.s32.totalorder %s11, 1
    %p138 = por %p136, %p137
    %p139 = scmp.ne.s32.totalorder %s131, %s134
    %p140 = scmp.eq.s32.totalorder %s11, 0
    %p141 = por %p139, %p140
    %p142 = scmp.ne.s32.totalorder %s131, %s134
    %p143 = scmp.eq.s32.totalorder %s16, 1
    %p144 = por %p142, %p143
    %p145 = scmp.ne.s32.totalorder %s134, %s135
    %p146 = scmp.eq.s32.totalorder %s16, 0
    %p147 = por %p145, %p146
    %p148 = scmp.ne.s32.totalorder %s134, %s135
    %p149 = scmp.eq.s32.totalorder %s17, 1
    %p150 = por %p148, %p149
    %p152 = scmp.ne.s32.totalorder %s135, %s151
    %p153 = scmp.eq.s32.totalorder %s17, 0
    %p154 = por %p152, %p153
    %p155 = scmp.le.s32.totalorder 1, %s11
    %p156 = scmp.lt.s32.totalorder %s11, 3
    %p157 = pnand %p155, %p156
    %p158 = pneg %p157
    // Predicated region
    $region9: #{forward.3} parent=5 // pred_check
      _
    $region10: #{forward.3} parent=5 // pred_check_branch
      %160 = sbr.rel (%p157) target = $region12
    $region11: #{forward.3} parent=5 // pred_region
      %s161 = ssub.s32 %s11, 1
      // Predicated region
      $region13: #{forward.3} parent=11 // pred_check
        %p162 = pneg %p58
      $region14: #{forward.3} parent=11 // pred_check_branch
        %164 = sbr.rel (%p162) target = $region16
      $region15: #{forward.3} parent=11 // pred_region
        _
      $region16: #{forward.3} parent=11 // pred_fallthru
        _
      // Predicated region
      $region17: #{forward.3} parent=11 // pred_check
        %p165 = pneg %p79
      $region18: #{forward.3} parent=11 // pred_check_branch
        %167 = sbr.rel (%p165) target = $region20
      $region19: #{forward.3} parent=11 // pred_region
        _
      $region20: #{forward.3} parent=11 // pred_fallthru
        _
      // Predicated region
      $region21: #{forward.3} parent=11 // pred_check
        %p168 = pneg %p100
      $region22: #{forward.3} parent=11 // pred_check_branch
        %170 = sbr.rel (%p168) target = $region24
      $region23: #{forward.3} parent=11 // pred_region
        _
      $region24: #{forward.3} parent=11 // pred_fallthru
        _
      // Predicated region
      $region25: #{forward.3} parent=11 // pred_check
        %p171 = pneg %p121
      $region26: #{forward.3} parent=11 // pred_check_branch
        %173 = sbr.rel (%p171) target = $region28
      $region27: #{forward.3} parent=11 // pred_region
        _
      $region28: #{forward.3} parent=11 // pred_fallthru
        _
    $region12: #{forward.3} parent=5 // pred_fallthru
      _
    %p174 = scmp.lt.s32.totalorder %s11, 2
    // Predicated region
    $region29: #{forward.3} parent=5 // pred_check
      %p175 = pneg %p174
    $region30: #{forward.3} parent=5 // pred_check_branch
      %177 = sbr.rel (%p175) target = $region32
    $region31: #{forward.3} parent=5 // pred_region
      // Predicated region
      $region33: #{forward.3} parent=31 // pred_check
        %p178 = pneg %p31
      $region34: #{forward.3} parent=31 // pred_check_branch
        %180 = sbr.rel (%p178) target = $region36
      $region35: #{forward.3} parent=31 // pred_region
        %p181 = scmp.lt.s32.totalorder %s11, 1
        %s182 = scalar_select %p181, %s11, 1
        %s183 = smul.addr %s182, 8
        %s184 = scalar_lea.vmem %s0, %s183
      $region36: #{forward.3} parent=31 // pred_fallthru
        _
    $region32: #{forward.3} parent=5 // pred_fallthru
      _
    %p185 = scmp.le.s32.totalorder 1, %s11
    %p186 = scmp.lt.s32.totalorder %s11, 3
    %p187 = pnand %p185, %p186
    %p188 = pneg %p187
    // Predicated region
    $region37: #{forward.3} parent=5 // pred_check
      _
    $region38: #{forward.3} parent=5 // pred_check_branch
      %190 = sbr.rel (%p187) target = $region40
    $region39: #{forward.3} parent=5 // pred_region
      %s191 = ssub.s32 %s11, 1
      %p192 = scmp.lt.s32.totalorder %s16, 1
      %s193 = scalar_select %p192, %s16, 1
      %s194 = smul.addr %s193, 8
      %s195 = scalar_lea.vmem %s0, %s194
      %p196 = pneg %p37
      %p197 = pneg %p34
      %p198 = pneg %p58
      %p199 = pneg %p55
      %p200 = pneg %p79
      %p201 = pneg %p76
      %p202 = pneg %p100
      %p203 = pneg %p97
      %p204 = pneg %p121
      %p205 = pneg %p118
      %p206 = pneg %p147
      %p207 = pneg %p144
      %p208 = scmp.lt.s32.totalorder %s16, 1
      %s209 = scalar_select %p208, %s16, 1
      %s210 = smul.addr %s209, 8
      %s211 = scalar_lea.vmem %s5, %s210
      %p212 = scmp.lt.s32.totalorder %s16, 1
      %s213 = scalar_select %p212, %s16, 1
      %s214 = smul.addr %s213, 8
      %s215 = scalar_lea.vmem %s0, %s214
      %p216 = scmp.lt.s32.totalorder %s16, 1
      %s217 = scalar_select %p216, %s16, 1
      %s218 = smul.addr %s217, 8
      %s219 = scalar_lea.vmem %s5, %s218
      %v220 = vld [vmem:[%s215] sm:$0xff]
      %v221 = vld [vmem:[%s1] sm:$0xff]
      %v222 = vld [vmem:[%s1 + $0x8] sm:$0xff]
      %v223 = vld [vmem:[%s1 + $0x10] sm:$0xff]
      %v224 = vld [vmem:[%s1 + $0x18] sm:$0xff]
      %v225 = vld [vmem:[%s2] sm:$0x1]
      %v227 = vlaneseq
      %v228 = vshrl.u32 %v227, 7
      %v229 = vsub.s32 0, %v228
      %v230 = vrot.slane %v225, %v229
      %vm232 = vcmask 261120
      %v234 = vsel %vm232, %v220, 0
      %236 = vmatprep.subr.mxu0 0.0
      %237 = vmatpush1.msra.mxu0 0.0
      %238 = vmatprep.subr.mxu0 0.0
      %239 = vmatpush1.msra.mxu0 0.0
      %240 = vmatprep.subr.mxu0 0.0
      %241 = vmatpush1.msra.mxu0 0.0
      %242 = vmatprep.subr.mxu0 0.0
      %243 = vmatpush1.msra.mxu0 0.0
      %244 = vmatprep.subr.mxu0 0.0
      %245 = vmatpush1.msra.mxu0 0.0
      %246 = vmatprep.subr.mxu0 0.0
      %247 = vmatpush1.msra.mxu0 0.0
      %248 = vmatprep.subr.mxu0 0.0
      %249 = vmatpush1.msra.mxu0 0.0
      %250 = vmatprep.subr.mxu0 0.0
      %251 = vmatpush1.msra.mxu0 0.0
      %252 = vmatprep.subr.mxu0 0.0
      %253 = vmatpush1.msra.mxu0 0.0
      %254 = vmatprep.subr.mxu0 0.0
      %255 = vmatpush1.msra.mxu0 0.0
      %256 = vmatprep.subr.mxu0 0.0
      %257 = vmatpush1.msra.mxu0 0.0
      %258 = vmatprep.subr.mxu0 0.0
      %259 = vmatpush1.msra.mxu0 0.0
      %260 = vmatprep.subr.mxu0 0.0
      %261 = vmatpush1.msra.mxu0 %v224
      %262 = vmatprep.subr.mxu0 0.0
      %263 = vmatpush1.msra.mxu0 %v223
      %264 = vmatprep.subr.mxu0 0.0
      %265 = vmatpush1.msra.mxu0 %v222
      %266 = vmatprep.subr.mxu0 0.0
      %267 = vmatpush1.msra.mxu0 %v221
      %268 = vmatprep.subr.mxu0 0.0
      %269 = vmatpush2.msra.mxu0 0.0
      %270 = vmatprep.subr.mxu0 0.0
      %271 = vmatpush2.msra.mxu0 0.0
      %272 = vmatprep.subr.mxu0 0.0
      %273 = vmatpush2.msra.mxu0 0.0
      %274 = vmatprep.subr.mxu0 0.0
      %275 = vmatpush2.msra.mxu0 0.0
      %276 = vmatprep.subr.mxu0 0.0
      %277 = vmatpush2.msra.mxu0 0.0
      %278 = vmatprep.subr.mxu0 0.0
      %279 = vmatpush2.msra.mxu0 0.0
      %280 = vmatprep.subr.mxu0 0.0
      %281 = vmatpush2.msra.mxu0 0.0
      %282 = vmatprep.subr.mxu0 0.0
      %283 = vmatpush2.msra.mxu0 0.0
      %284 = vmatprep.subr.mxu0 0.0
      %285 = vmatpush2.msra.mxu0 0.0
      %286 = vmatprep.subr.mxu0 0.0
      %287 = vmatpush2.msra.mxu0 0.0
      %288 = vmatprep.subr.mxu0 0.0
      %289 = vmatpush2.msra.mxu0 0.0
      %290 = vmatprep.subr.mxu0 0.0
      %291 = vmatpush2.msra.mxu0 0.0
      %292 = vmatprep.subr.mxu0 0.0
      %293 = vmatpush2.msra.mxu0 0.0
      %294 = vmatprep.subr.mxu0 0.0
      %295 = vmatpush2.msra.mxu0 0.0
      %296 = vmatprep.subr.mxu0 0.0
      %297 = vmatpush2.msra.mxu0 0.0
      %298 = vmatprep.subr.mxu0 0.0
      %299 = vmatpush2.msra.mxu0 0.0
      %300 = vmatprep.mubr.f32.mxu0 0.0
      %301 = vmatmul.mubr.f32.gmra.mxu0 %v234
      %v302 = vpop.f32.mrf.mxu0
      %v303 = vadd.f32 %v230, %v302
      %v304 = vpop.f32.mrf.mxu0
      %305 = vdwg.mxu0
      %v306 = vmax.f32 %v303, 0.0
      %v307 = vld [vmem:[%s3] sm:$0xff]
      %v308 = vld [vmem:[%s3 + $0x8] sm:$0xff]
      %v309 = vld [vmem:[%s3 + $0x10] sm:$0xff]
      %v310 = vld [vmem:[%s3 + $0x18] sm:$0xff]
      %v311 = vld [vmem:[%s4] sm:$0x1]
      %v313 = vlaneseq
      %v314 = vshrl.u32 %v313, 7
      %v315 = vsub.s32 0, %v314
      %v316 = vrot.slane %v311, %v315
      %v319 = vsel %vm232, %v306, 0
      %321 = vmatprep.subr.mxu0 0.0
      %322 = vmatpush1.msra.mxu0 0.0
      %323 = vmatprep.subr.mxu0 0.0
      %324 = vmatpush1.msra.mxu0 0.0
      %325 = vmatprep.subr.mxu0 0.0
      %326 = vmatpush1.msra.mxu0 0.0
      %327 = vmatprep.subr.mxu0 0.0
      %328 = vmatpush1.msra.mxu0 0.0
      %329 = vmatprep.subr.mxu0 0.0
      %330 = vmatpush1.msra.mxu0 0.0
      %331 = vmatprep.subr.mxu0 0.0
      %332 = vmatpush1.msra.mxu0 0.0
      %333 = vmatprep.subr.mxu0 0.0
      %334 = vmatpush1.msra.mxu0 0.0
      %335 = vmatprep.subr.mxu0 0.0
      %336 = vmatpush1.msra.mxu0 0.0
      %337 = vmatprep.subr.mxu0 0.0
      %338 = vmatpush1.msra.mxu0 0.0
      %339 = vmatprep.subr.mxu0 0.0
      %340 = vmatpush1.msra.mxu0 0.0
      %341 = vmatprep.subr.mxu0 0.0
      %342 = vmatpush1.msra.mxu0 0.0
      %343 = vmatprep.subr.mxu0 0.0
      %344 = vmatpush1.msra.mxu0 0.0
      %345 = vmatprep.subr.mxu0 0.0
      %346 = vmatpush1.msra.mxu0 %v310
      %347 = vmatprep.subr.mxu0 0.0
      %348 = vmatpush1.msra.mxu0 %v309
      %349 = vmatprep.subr.mxu0 0.0
      %350 = vmatpush1.msra.mxu0 %v308
      %351 = vmatprep.subr.mxu0 0.0
      %352 = vmatpush1.msra.mxu0 %v307
      %353 = vmatprep.subr.mxu0 0.0
      %354 = vmatpush2.msra.mxu0 0.0
      %355 = vmatprep.subr.mxu0 0.0
      %356 = vmatpush2.msra.mxu0 0.0
      %357 = vmatprep.subr.mxu0 0.0
      %358 = vmatpush2.msra.mxu0 0.0
      %359 = vmatprep.subr.mxu0 0.0
      %360 = vmatpush2.msra.mxu0 0.0
      %361 = vmatprep.subr.mxu0 0.0
      %362 = vmatpush2.msra.mxu0 0.0
      %363 = vmatprep.subr.mxu0 0.0
      %364 = vmatpush2.msra.mxu0 0.0
      %365 = vmatprep.subr.mxu0 0.0
      %366 = vmatpush2.msra.mxu0 0.0
      %367 = vmatprep.subr.mxu0 0.0
      %368 = vmatpush2.msra.mxu0 0.0
      %369 = vmatprep.subr.mxu0 0.0
      %370 = vmatpush2.msra.mxu0 0.0
      %371 = vmatprep.subr.mxu0 0.0
      %372 = vmatpush2.msra.mxu0 0.0
      %373 = vmatprep.subr.mxu0 0.0
      %374 = vmatpush2.msra.mxu0 0.0
      %375 = vmatprep.subr.mxu0 0.0
      %376 = vmatpush2.msra.mxu0 0.0
      %377 = vmatprep.subr.mxu0 0.0
      %378 = vmatpush2.msra.mxu0 0.0
      %379 = vmatprep.subr.mxu0 0.0
      %380 = vmatpush2.msra.mxu0 0.0
      %381 = vmatprep.subr.mxu0 0.0
      %382 = vmatpush2.msra.mxu0 0.0
      %383 = vmatprep.subr.mxu0 0.0
      %384 = vmatpush2.msra.mxu0 0.0
      %385 = vmatprep.mubr.f32.mxu0 0.0
      %386 = vmatmul.mubr.f32.gmra.mxu0 %v319
      %v387 = vpop.f32.mrf.mxu0
      %v388 = vadd.f32 %v316, %v387
      %v389 = vpop.f32.mrf.mxu0
      %390 = vdwg.mxu0
      %391 = vmax.xlane.f32.xlu0 %v388
      %v392 = vpop.xlane.xlu0 %391
      %v393 = vsub.f32 %v388, %v392
      %v394 = vmul.f32 %v393, 1.442695
      %v395 = vpow.pop %v394
      %396 = vadd.xlane.f32.xlu0 %v395
      %v397 = vpop.xlane.xlu0 %396
      %v398 = vrcp.pop %v397
      %v399 = vmul.f32 %v395, %v398
      %400 = vst [vmem:[%s219] sm:$0xff] %v399
      %p401 = scmp.lt.s32.totalorder %s16, 1
      %s402 = scalar_select %p401, %s16, 1
      %s403 = smul.addr %s402, 8
      %s404 = scalar_lea.vmem %s5, %s403
      // Predicated region
      $region41: #{forward.3} parent=39 // pred_check
        %p405 = pneg %p144
      $region42: #{forward.3} parent=39 // pred_check_branch
        %407 = sbr.rel (%p405) target = $region44
      $region43: #{forward.3} parent=39 // pred_region
        _
      $region44: #{forward.3} parent=39 // pred_fallthru
        _
    $region40: #{forward.3} parent=5 // pred_fallthru
      _
    %p408 = scmp.le.s32.totalorder 2, %s11
    // Predicated region
    $region45: #{forward.3} parent=5 // pred_check
      %p409 = pneg %p408
    $region46: #{forward.3} parent=5 // pred_check_branch
      %411 = sbr.rel (%p409) target = $region48
    $region47: #{forward.3} parent=5 // pred_region
      %s412 = ssub.s32 %s11, 2
      // Predicated region
      $region49: #{forward.3} parent=47 // pred_check
        %p413 = pneg %p150
      $region50: #{forward.3} parent=47 // pred_check_branch
        %415 = sbr.rel (%p413) target = $region52
      $region51: #{forward.3} parent=47 // pred_region
        %p416 = scmp.lt.s32.totalorder %s17, 1
        %s417 = scalar_select %p416, %s17, 1
        %s418 = smul.addr %s417, 8
        %s419 = scalar_lea.vmem %s5, %s418
      $region52: #{forward.3} parent=47 // pred_fallthru
        _
    $region48: #{forward.3} parent=5 // pred_fallthru
      _
  $region6: #{forward.3} parent=0 // loop_footer
    %s15 = sadd.s32 1, %s11
  $region7: #{forward.3} parent=0 // loop_footer_branch
    %10 = sbr.rel target = $region3
  $region8: #{forward.3} parent=0 // loop_exit
    _

// kernel: forward.2
$region0: #{forward.2}
  #allocation0 [shape = 'u32[]', space=smem, size = 0x4, offset = 0x4, fixed_abs, tag = 'smem constant byte address 0x4 - core index']
  #allocation1 [shape = 'u32[144,128]{1,0:T(1,128)}', space=vmem, size = 0x12000, scoped, tag = 'internal scratch']
  #allocation2 [shape = 'f32[1,256]{1,0:T(1,128)}', space=vmem, size = 0x400, scoped, tag = 'scratch operand']
  %s0 = inlined_call_operand.vmem [shape: f32[16,8], index: 0, kind: input, shape index: {}]
  %s1 = inlined_call_operand.vmem [shape: f32[16,8], index: 1, kind: input, shape index: {}]
  %s2 = inlined_call_operand.vmem [shape: f32[1,256], index: 2, kind: input, shape index: {}, may-alias: {2,9}]
  %s3 = inlined_call_operand.vmem [shape: f32[1,256], index: 3, kind: input, shape index: {}]
  %s4 = inlined_call_operand.vmem [shape: f32[1,256], index: 4, kind: input, shape index: {}]
  %s5 = inlined_call_operand.vmem [shape: f32[8,256], index: 5, kind: input, shape index: {}]
  %s6 = inlined_call_operand.hbm [shape: f32[256,256], index: 6, kind: input, shape index: {}]
  %s7 = inlined_call_operand.vmem [shape: f32[256,32], index: 7, kind: input, shape index: {}]
  %s8 = inlined_call_operand.vmem [shape: f32[16,32], index: 8, kind: output, shape index: {0}]
  %s9 = inlined_call_operand.vmem [shape: f32[1,256], index: 9, kind: output, shape index: {1}, may-alias: {2,9}]
  %10 = xla_tuple %s8, %s9
  %s11 = sld [smem:[#allocation0]]
  $region81: #{forward.2} parent=0
    _
  %s13 = ssub.s32 1, %s11
  %s14 = scalar_select 0, %s13, %s11
  $region1: #{forward.2} parent=0
    #allocation3 [shape = 'u8[262144]{0}', space=vmem, size = 0x40000, scoped, tag = 'input window, operand 6, single buffered']
    #allocation4 [shape = 's32[2]{0}', space=sflag, size = 0x8, scoped, tag = 'scoped memory for forward.2']
    %15 = vsyncpa [#allocation4], 0
    loop: start=0, step=1, limit=4
    $region2: #{forward.2} parent=1 // loop_pre_header
      _
    $region3: #{forward.2} parent=1 // loop_header
      %s17 = sphi 0, %s21
      %p18 = scmp.ge.s32.totalorder %s17, 4
      %s27 = sphi 0, %s29
      %s30 = sphi 0, %s27
      %s31 = sphi 0, %s30
      %s47 = sphi 0, %s31
      %s53 = sphi 0, %s55
      %s56 = sphi 0, %s53
      %s57 = sphi 0, %s56
      %s73 = sphi 0, %s57
      %s77 = sphi 0, %s77
      %s79 = sphi 0, %s77
      %s80 = sphi 0, %s79
      %s94 = sphi 0, %s80
      %s98 = sphi 0, %s98
      %s100 = sphi 0, %s98
      %s101 = sphi 0, %s100
      %s115 = sphi 0, %s101
      %s119 = sphi 0, %s119
      %s121 = sphi 0, %s119
      %s122 = sphi 0, %s121
      %s136 = sphi 0, %s122
      %s140 = sphi 0, %s140
      %s142 = sphi 0, %s140
      %s143 = sphi 0, %s142
      %s157 = sphi 0, %s143
      %s161 = sphi 0, %s161
      %s163 = sphi 0, %s161
      %s164 = sphi 0, %s163
      %s178 = sphi 0, %s164
      %s182 = sphi 0, %s182
      %s184 = sphi 0, %s182
      %s185 = sphi 0, %s184
      %s199 = sphi 0, %s185
      %s205 = sphi 0, %s207
      %s208 = sphi 0, %s205
      %s209 = sphi 0, %s208
      %s225 = sphi 0, %s209
      %s229 = sphi 0, %s229
      %s231 = sphi 0, %s229
      %s232 = sphi 0, %s231
      %s246 = sphi 0, %s232
    $region4: #{forward.2} parent=1 // loop_header_branch
      %20 = sbr.rel (%p18) target = $region8
    $region5: #{forward.2} parent=1 // loop_body
      %s22 = ssub.s32 %s17, 1
      %s23 = ssub.s32 %s17, 2
      %s24 = sadd.s32 %s17, 1
      %s25 = ssub.s32 %s17, %s24
      %p26 = scmp.eq.s32.totalorder %s25, 0
      %s28 = sadd.s32 %s27, 1
      %s29 = scalar_select %p26, %s27, %s28
      %p32 = pneg %p26
      %p33 = scmp.eq.s32.totalorder %s17, 1
      %p34 = por %p32, %p33
      %p35 = scmp.ne.s32.totalorder %s27, %s30
      %p36 = scmp.eq.s32.totalorder %s17, 0
      %p37 = por %p35, %p36
      %p38 = scmp.ne.s32.totalorder %s27, %s30
      %p39 = scmp.eq.s32.totalorder %s22, 1
      %p40 = por %p38, %p39
      %p41 = scmp.ne.s32.totalorder %s30, %s31
      %p42 = scmp.eq.s32.totalorder %s22, 0
      %p43 = por %p41, %p42
      %p44 = scmp.ne.s32.totalorder %s30, %s31
      %p45 = scmp.eq.s32.totalorder %s23, 1
      %p46 = por %p44, %p45
      %p48 = scmp.ne.s32.totalorder %s31, %s47
      %p49 = scmp.eq.s32.totalorder %s23, 0
      %p50 = por %p48, %p49
      %s51 = ssub.s32 %s17, %s24
      %p52 = scmp.eq.s32.totalorder %s51, 0
      %s54 = sadd.s32 %s53, 1
      %s55 = scalar_select %p52, %s53, %s54
      %p58 = pneg %p52
      %p59 = scmp.eq.s32.totalorder %s17, 1
      %p60 = por %p58, %p59
      %p61 = scmp.ne.s32.totalorder %s53, %s56
      %p62 = scmp.eq.s32.totalorder %s17, 0
      %p63 = por %p61, %p62
      %p64 = scmp.ne.s32.totalorder %s53, %s56
      %p65 = scmp.eq.s32.totalorder %s22, 1
      %p66 = por %p64, %p65
      %p67 = scmp.ne.s32.totalorder %s56, %s57
      %p68 = scmp.eq.s32.totalorder %s22, 0
      %p69 = por %p67, %p68
      %p70 = scmp.ne.s32.totalorder %s56, %s57
      %p71 = scmp.eq.s32.totalorder %s23, 1
      %p72 = por %p70, %p71
      %p74 = scmp.ne.s32.totalorder %s57, %s73
      %p75 = scmp.eq.s32.totalorder %s23, 0
      %p76 = por %p74, %p75
      %s78 = sadd.s32 %s77, 1
      %p81 = scmp.eq.s32.totalorder %s17, 1
      %p82 = scmp.ne.s32.totalorder %s77, %s79
      %p83 = scmp.eq.s32.totalorder %s17, 0
      %p84 = por %p82, %p83
      %p85 = scmp.ne.s32.totalorder %s77, %s79
      %p86 = scmp.eq.s32.totalorder %s22, 1
      %p87 = por %p85, %p86
      %p88 = scmp.ne.s32.totalorder %s79, %s80
      %p89 = scmp.eq.s32.totalorder %s22, 0
      %p90 = por %p88, %p89
      %p91 = scmp.ne.s32.totalorder %s79, %s80
      %p92 = scmp.eq.s32.totalorder %s23, 1
      %p93 = por %p91, %p92
      %p95 = scmp.ne.s32.totalorder %s80, %s94
      %p96 = scmp.eq.s32.totalorder %s23, 0
      %p97 = por %p95, %p96
      %s99 = sadd.s32 %s98, 1
      %p102 = scmp.eq.s32.totalorder %s17, 1
      %p103 = scmp.ne.s32.totalorder %s98, %s100
      %p104 = scmp.eq.s32.totalorder %s17, 0
      %p105 = por %p103, %p104
      %p106 = scmp.ne.s32.totalorder %s98, %s100
      %p107 = scmp.eq.s32.totalorder %s22, 1
      %p108 = por %p106, %p107
      %p109 = scmp.ne.s32.totalorder %s100, %s101
      %p110 = scmp.eq.s32.totalorder %s22, 0
      %p111 = por %p109, %p110
      %p112 = scmp.ne.s32.totalorder %s100, %s101
      %p113 = scmp.eq.s32.totalorder %s23, 1
      %p114 = por %p112, %p113
      %p116 = scmp.ne.s32.totalorder %s101, %s115
      %p117 = scmp.eq.s32.totalorder %s23, 0
      %p118 = por %p116, %p117
      %s120 = sadd.s32 %s119, 1
      %p123 = scmp.eq.s32.totalorder %s17, 1
      %p124 = scmp.ne.s32.totalorder %s119, %s121
      %p125 = scmp.eq.s32.totalorder %s17, 0
      %p126 = por %p124, %p125
      %p127 = scmp.ne.s32.totalorder %s119, %s121
      %p128 = scmp.eq.s32.totalorder %s22, 1
      %p129 = por %p127, %p128
      %p130 = scmp.ne.s32.totalorder %s121, %s122
      %p131 = scmp.eq.s32.totalorder %s22, 0
      %p132 = por %p130, %p131
      %p133 = scmp.ne.s32.totalorder %s121, %s122
      %p134 = scmp.eq.s32.totalorder %s23, 1
      %p135 = por %p133, %p134
      %p137 = scmp.ne.s32.totalorder %s122, %s136
      %p138 = scmp.eq.s32.totalorder %s23, 0
      %p139 = por %p137, %p138
      %s141 = sadd.s32 %s140, 1
      %p144 = scmp.eq.s32.totalorder %s17, 1
      %p145 = scmp.ne.s32.totalorder %s140, %s142
      %p146 = scmp.eq.s32.totalorder %s17, 0
      %p147 = por %p145, %p146
      %p148 = scmp.ne.s32.totalorder %s140, %s142
      %p149 = scmp.eq.s32.totalorder %s22, 1
      %p150 = por %p148, %p149
      %p151 = scmp.ne.s32.totalorder %s142, %s143
      %p152 = scmp.eq.s32.totalorder %s22, 0
      %p153 = por %p151, %p152
      %p154 = scmp.ne.s32.totalorder %s142, %s143
      %p155 = scmp.eq.s32.totalorder %s23, 1
      %p156 = por %p154, %p155
      %p158 = scmp.ne.s32.totalorder %s143, %s157
      %p159 = scmp.eq.s32.totalorder %s23, 0
      %p160 = por %p158, %p159
      %s162 = sadd.s32 %s161, 1
      %p165 = scmp.eq.s32.totalorder %s17, 1
      %p166 = scmp.ne.s32.totalorder %s161, %s163
      %p167 = scmp.eq.s32.totalorder %s17, 0
      %p168 = por %p166, %p167
      %p169 = scmp.ne.s32.totalorder %s161, %s163
      %p170 = scmp.eq.s32.totalorder %s22, 1
      %p171 = por %p169, %p170
      %p172 = scmp.ne.s32.totalorder %s163, %s164
      %p173 = scmp.eq.s32.totalorder %s22, 0
      %p174 = por %p172, %p173
      %p175 = scmp.ne.s32.totalorder %s163, %s164
      %p176 = scmp.eq.s32.totalorder %s23, 1
      %p177 = por %p175, %p176
      %p179 = scmp.ne.s32.totalorder %s164, %s178
      %p180 = scmp.eq.s32.totalorder %s23, 0
      %p181 = por %p179, %p180
      %s183 = sadd.s32 %s182, 1
      %p186 = scmp.eq.s32.totalorder %s17, 1
      %p187 = scmp.ne.s32.totalorder %s182, %s184
      %p188 = scmp.eq.s32.totalorder %s17, 0
      %p189 = por %p187, %p188
      %p190 = scmp.ne.s32.totalorder %s182, %s184
      %p191 = scmp.eq.s32.totalorder %s22, 1
      %p192 = por %p190, %p191
      %p193 = scmp.ne.s32.totalorder %s184, %s185
      %p194 = scmp.eq.s32.totalorder %s22, 0
      %p195 = por %p193, %p194
      %p196 = scmp.ne.s32.totalorder %s184, %s185
      %p197 = scmp.eq.s32.totalorder %s23, 1
      %p198 = por %p196, %p197
      %p200 = scmp.ne.s32.totalorder %s185, %s199
      %p201 = scmp.eq.s32.totalorder %s23, 0
      %p202 = por %p200, %p201
      %s203 = ssub.s32 %s17, %s24
      %p204 = scmp.eq.s32.totalorder %s203, 0
      %s206 = sadd.s32 %s205, 1
      %s207 = scalar_select %p204, %s205, %s206
      %p210 = pneg %p204
      %p211 = scmp.eq.s32.totalorder %s17, 1
      %p212 = por %p210, %p211
      %p213 = scmp.ne.s32.totalorder %s205, %s208
      %p214 = scmp.eq.s32.totalorder %s17, 0
      %p215 = por %p213, %p214
      %p216 = scmp.ne.s32.totalorder %s205, %s208
      %p217 = scmp.eq.s32.totalorder %s22, 1
      %p218 = por %p216, %p217
      %p219 = scmp.ne.s32.totalorder %s208, %s209
      %p220 = scmp.eq.s32.totalorder %s22, 0
      %p221 = por %p219, %p220
      %p222 = scmp.ne.s32.totalorder %s208, %s209
      %p223 = scmp.eq.s32.totalorder %s23, 1
      %p224 = por %p222, %p223
      %p226 = scmp.ne.s32.totalorder %s209, %s225
      %p227 = scmp.eq.s32.totalorder %s23, 0
      %p228 = por %p226, %p227
      %s230 = sadd.s32 %s229, 1
      %p233 = scmp.eq.s32.totalorder %s17, 1
      %p234 = scmp.ne.s32.totalorder %s229, %s231
      %p235 = scmp.eq.s32.totalorder %s17, 0
      %p236 = por %p234, %p235
      %p237 = scmp.ne.s32.totalorder %s229, %s231
      %p238 = scmp.eq.s32.totalorder %s22, 1
      %p239 = por %p237, %p238
      %p240 = scmp.ne.s32.totalorder %s231, %s232
      %p241 = scmp.eq.s32.totalorder %s22, 0
      %p242 = por %p240, %p241
      %p243 = scmp.ne.s32.totalorder %s231, %s232
      %p244 = scmp.eq.s32.totalorder %s23, 1
      %p245 = por %p243, %p244
      %p247 = scmp.ne.s32.totalorder %s232, %s246
      %p248 = scmp.eq.s32.totalorder %s23, 0
      %p249 = por %p247, %p248
      %p250 = scmp.le.s32.totalorder 1, %s17
      %p251 = scmp.lt.s32.totalorder %s17, 3
      %p252 = pnand %p250, %p251
      %p253 = pneg %p252
      // Predicated region
      $region9: #{forward.2} parent=5 // pred_check
        _
      $region10: #{forward.2} parent=5 // pred_check_branch
        %255 = sbr.rel (%p252) target = $region12
      $region11: #{forward.2} parent=5 // pred_region
        %s256 = ssub.s32 %s17, 1
        // Predicated region
        $region13: #{forward.2} parent=11 // pred_check
          %p257 = pneg %p90
        $region14: #{forward.2} parent=11 // pred_check_branch
          %259 = sbr.rel (%p257) target = $region16
        $region15: #{forward.2} parent=11 // pred_region
          _
        $region16: #{forward.2} parent=11 // pred_fallthru
          _
        // Predicated region
        $region17: #{forward.2} parent=11 // pred_check
          %p260 = pneg %p111
        $region18: #{forward.2} parent=11 // pred_check_branch
          %262 = sbr.rel (%p260) target = $region20
        $region19: #{forward.2} parent=11 // pred_region
          _
        $region20: #{forward.2} parent=11 // pred_fallthru
          _
        // Predicated region
        $region21: #{forward.2} parent=11 // pred_check
          %p263 = pneg %p132
        $region22: #{forward.2} parent=11 // pred_check_branch
          %265 = sbr.rel (%p263) target = $region24
        $region23: #{forward.2} parent=11 // pred_region
          _
        $region24: #{forward.2} parent=11 // pred_fallthru
          _
        // Predicated region
        $region25: #{forward.2} parent=11 // pred_check
          %p266 = pneg %p153
        $region26: #{forward.2} parent=11 // pred_check_branch
          %268 = sbr.rel (%p266) target = $region28
        $region27: #{forward.2} parent=11 // pred_region
          _
        $region28: #{forward.2} parent=11 // pred_fallthru
          _
        // Predicated region
        $region29: #{forward.2} parent=11 // pred_check
          %p269 = pneg %p174
        $region30: #{forward.2} parent=11 // pred_check_branch
          %271 = sbr.rel (%p269) target = $region32
        $region31: #{forward.2} parent=11 // pred_region
          %s273 = ssub.s32 8192, 8192
          %274 = vsyncadd [#allocation4], %s273
          %s275 = sshll.u32 [#allocation3], 4
          %s276 = int_to_ptr.vmem [resolvable:$true] %s275
          %281 = dma.hbm_to_vmem [thread:$0]  %s6, 8192, %s276, [#allocation4], 256, 256, 16
        $region32: #{forward.2} parent=11 // pred_fallthru
          _
        // Predicated region
        $region33: #{forward.2} parent=11 // pred_check
          %p282 = pneg %p195
        $region34: #{forward.2} parent=11 // pred_check_branch
          %284 = sbr.rel (%p282) target = $region36
        $region35: #{forward.2} parent=11 // pred_region
          _
        $region36: #{forward.2} parent=11 // pred_fallthru
          _
      $region12: #{forward.2} parent=5 // pred_fallthru
        _
      %p285 = scmp.lt.s32.totalorder %s17, 2
      // Predicated region
      $region37: #{forward.2} parent=5 // pred_check
        %p286 = pneg %p285
      $region38: #{forward.2} parent=5 // pred_check_branch
        %288 = sbr.rel (%p286) target = $region40
      $region39: #{forward.2} parent=5 // pred_region
        // Predicated region
        $region41: #{forward.2} parent=39 // pred_check
          %p289 = pneg %p37
        $region42: #{forward.2} parent=39 // pred_check_branch
          %291 = sbr.rel (%p289) target = $region44
        $region43: #{forward.2} parent=39 // pred_region
          %p292 = scmp.lt.s32.totalorder %s17, 1
          %s293 = scalar_select %p292, %s17, 1
          %s294 = smul.addr %s293, 8
          %s295 = scalar_lea.vmem %s0, %s294
        $region44: #{forward.2} parent=39 // pred_fallthru
          _
        // Predicated region
        $region45: #{forward.2} parent=39 // pred_check
          %p296 = pneg %p63
        $region46: #{forward.2} parent=39 // pred_check_branch
          %298 = sbr.rel (%p296) target = $region48
        $region47: #{forward.2} parent=39 // pred_region
          %p299 = scmp.lt.s32.totalorder %s17, 1
          %s300 = scalar_select %p299, %s17, 1
          %s301 = smul.addr %s300, 8
          %s302 = scalar_lea.vmem %s1, %s301
        $region48: #{forward.2} parent=39 // pred_fallthru
          _
      $region40: #{forward.2} parent=5 // pred_fallthru
        _
      %p303 = scmp.le.s32.totalorder 1, %s17
      %p304 = scmp.lt.s32.totalorder %s17, 3
      %p305 = pnand %p303, %p304
      %p306 = pneg %p305
      // Predicated region
      $region49: #{forward.2} parent=5 // pred_check
        _
      $region50: #{forward.2} parent=5 // pred_check_branch
        %308 = sbr.rel (%p305) target = $region52
      $region51: #{forward.2} parent=5 // pred_region
        %s309 = ssub.s32 %s17, 1
        // Predicated region
        $region53: #{forward.2} parent=51 // pred_check
          %p310 = pneg %p174
        $region54: #{forward.2} parent=51 // pred_check_branch
          %312 = sbr.rel (%p310) target = $region56
        $region55: #{forward.2} parent=51 // pred_region
          %313 = dma.done [#allocation4], 8192
        $region56: #{forward.2} parent=51 // pred_fallthru
          _
        %p314 = scmp.lt.s32.totalorder %s22, 1
        %s315 = scalar_select %p314, %s22, 1
        %s316 = smul.addr %s315, 8
        %s317 = scalar_lea.vmem %s0, %s316
        %p318 = pneg %p43
        %p319 = pneg %p40
        %p320 = scmp.lt.s32.totalorder %s22, 1
        %s321 = scalar_select %p320, %s22, 1
        %s322 = smul.addr %s321, 8
        %s323 = scalar_lea.vmem %s1, %s322
        %p324 = pneg %p69
        %p325 = pneg %p66
        %p326 = pneg %p90
        %p327 = pneg %p87
        %p328 = pneg %p111
        %p329 = pneg %p108
        %p330 = pneg %p132
        %p331 = pneg %p129
        %p332 = pneg %p153
        %p333 = pneg %p150
        %p334 = pneg %p174
        %p335 = pneg %p171
        %p336 = pneg %p195
        %p337 = pneg %p192
        %p338 = pneg %p221
        %p339 = pneg %p218
        %p340 = scmp.lt.s32.totalorder %s22, 1
        %s341 = scalar_select %p340, %s22, 1
        %s342 = smul.addr %s341, 8
        %s343 = scalar_lea.vmem %s8, %s342
        %p344 = pneg %p242
        %p345 = pneg %p239
        %p346 = scmp.lt.s32.totalorder %s22, 1
        %s347 = scalar_select %p346, %s22, 1
        %s348 = smul.addr %s347, 8
        %s349 = scalar_lea.vmem %s0, %s348
        %p350 = scmp.lt.s32.totalorder %s22, 1
        %s351 = scalar_select %p350, %s22, 1
        %s352 = smul.addr %s351, 8
        %s353 = scalar_lea.vmem %s1, %s352
        %p354 = scmp.lt.s32.totalorder %s22, 1
        %s355 = scalar_select %p354, %s22, 1
        %s356 = smul.addr %s355, 8
        %s357 = scalar_lea.vmem %s8, %s356
        %p358 = scmp.eq.s32.totalorder %s22, 0
        // Predicated region
        $region57: #{forward.2} parent=51 // pred_check
          %p359 = pneg %p358
        $region58: #{forward.2} parent=51 // pred_check_branch
          %361 = sbr.rel (%p359) target = $region60
        $region59: #{forward.2} parent=51 // pred_region
          %v362 = vld [vmem:[%s2] sm:$0x3]
          %v363 = vlaneseq
          %vm364 = vcmp.ge.s32.totalorder %v363, 0
          %vm365 = vcmp.lt.s32.totalorder %v363, 256
          %vm366 = vmand %vm364, %vm365
          %367 = vst.msk [vmem:[#allocation2] sm:$0x3] %vm366, %v362
        $region60: #{forward.2} parent=51 // pred_fallthru
          _
        %v368 = vld [vmem:[%s349] sm:$0xff]
        %v369 = vld [vmem:[%s353] sm:$0xff]
        %v370 = vld [vmem:[%s5] sm:$0xff]
        %v371 = vld [vmem:[%s5 + $0x8] sm:$0xff]
        %v372 = vpack.c.bf16 %v368, %v368
        %v373 = vunpack.c.l.bf16 %v372
        %v374 = vsub.f32 %v368, %v373
        %vm375 = vcmask 64512
        %v377 = vsel %vm375, %v374, 0
        %379 = vmatprep.subr.mxu0 0.0
        %380 = vmatpush1.msra.mxu0 0.0
        %381 = vmatprep.subr.mxu0 0.0
        %382 = vmatpush1.msra.mxu0 0.0
        %383 = vmatprep.subr.mxu0 0.0
        %384 = vmatpush1.msra.mxu0 0.0
        %385 = vmatprep.subr.mxu0 0.0
        %386 = vmatpush1.msra.mxu0 0.0
        %387 = vmatprep.subr.mxu0 0.0
        %388 = vmatpush1.msra.mxu0 0.0
        %389 = vmatprep.subr.mxu0 0.0
        %390 = vmatpush1.msra.mxu0 0.0
        %391 = vmatprep.subr.mxu0 0.0
        %392 = vmatpush1.msra.mxu0 0.0
        %393 = vmatprep.subr.mxu0 0.0
        %394 = vmatpush1.msra.mxu0 0.0
        %395 = vmatprep.subr.mxu0 0.0
        %396 = vmatpush1.msra.mxu0 0.0
        %397 = vmatprep.subr.mxu0 0.0
        %398 = vmatpush1.msra.mxu0 0.0
        %399 = vmatprep.subr.mxu0 0.0
        %400 = vmatpush1.msra.mxu0 0.0
        %401 = vmatprep.subr.mxu0 0.0
        %402 = vmatpush1.msra.mxu0 0.0
        %403 = vmatprep.subr.mxu0 0.0
        %404 = vmatpush1.msra.mxu0 0.0
        %405 = vmatprep.subr.mxu0 0.0
        %406 = vmatpush1.msra.mxu0 0.0
        %407 = vmatprep.subr.mxu0 0.0
        %408 = vmatpush1.msra.mxu0 0.0
        %409 = vmatprep.subr.mxu0 %v371
        %410 = vmatpush1.msra.mxu0 %v370
        %411 = vmatprep.subr.mxu0 0.0
        %412 = vmatpush2.msra.mxu0 0.0
        %413 = vmatprep.subr.mxu0 0.0
        %414 = vmatpush2.msra.mxu0 0.0
        %415 = vmatprep.subr.mxu0 0.0
        %416 = vmatpush2.msra.mxu0 0.0
        %417 = vmatprep.subr.mxu0 0.0
        %418 = vmatpush2.msra.mxu0 0.0
        %419 = vmatprep.subr.mxu0 0.0
        %420 = vmatpush2.msra.mxu0 0.0
        %421 = vmatprep.subr.mxu0 0.0
        %422 = vmatpush2.msra.mxu0 0.0
        %423 = vmatprep.subr.mxu0 0.0
        %424 = vmatpush2.msra.mxu0 0.0
        %425 = vmatprep.subr.mxu0 0.0
        %426 = vmatpush2.msra.mxu0 0.0
        %427 = vmatprep.subr.mxu0 0.0
        %428 = vmatpush2.msra.mxu0 0.0
        %429 = vmatprep.subr.mxu0 0.0
        %430 = vmatpush2.msra.mxu0 0.0
        %431 = vmatprep.subr.mxu0 0.0
        %432 = vmatpush2.msra.mxu0 0.0
        %433 = vmatprep.subr.mxu0 0.0
        %434 = vmatpush2.msra.mxu0 0.0
        %435 = vmatprep.subr.mxu0 0.0
        %436 = vmatpush2.msra.mxu0 0.0
        %437 = vmatprep.subr.mxu0 0.0
        %438 = vmatpush2.msra.mxu0 0.0
        %439 = vmatprep.subr.mxu0 0.0
        %440 = vmatpush2.msra.mxu0 0.0
        %441 = vmatprep.subr.mxu0 0.0
        %442 = vmatpush2.msra.mxu0 0.0
        %443 = vmatprep.mubr.f32.mxu0 0.0
        %444 = vmatmul.mubr.f32.gmra.mxu0 %v377
        %v445 = vpop.f32.mrf.mxu0
        %v446 = vadd.f32 0.0, %v445
        %v447 = vpop.f32.mrf.mxu0
        %v448 = vadd.f32 0.0, %v447
        %449 = vdwg.mxu0
        %v451 = vsel %vm375, %v373, 0
        %453 = vmatprep.subr.mxu0 0.0
        %454 = vmatpush1.msra.mxu0 0.0
        %455 = vmatprep.subr.mxu0 0.0
        %456 = vmatpush1.msra.mxu0 0.0
        %457 = vmatprep.subr.mxu0 0.0
        %458 = vmatpush1.msra.mxu0 0.0
        %459 = vmatprep.subr.mxu0 0.0
        %460 = vmatpush1.msra.mxu0 0.0
        %461 = vmatprep.subr.mxu0 0.0
        %462 = vmatpush1.msra.mxu0 0.0
        %463 = vmatprep.subr.mxu0 0.0
        %464 = vmatpush1.msra.mxu0 0.0
        %465 = vmatprep.subr.mxu0 0.0
        %466 = vmatpush1.msra.mxu0 0.0
        %467 = vmatprep.subr.mxu0 0.0
        %468 = vmatpush1.msra.mxu0 0.0
        %469 = vmatprep.subr.mxu0 0.0
        %470 = vmatpush1.msra.mxu0 0.0
        %471 = vmatprep.subr.mxu0 0.0
        %472 = vmatpush1.msra.mxu0 0.0
        %473 = vmatprep.subr.mxu0 0.0
        %474 = vmatpush1.msra.mxu0 0.0
        %475 = vmatprep.subr.mxu0 0.0
        %476 = vmatpush1.msra.mxu0 0.0
        %477 = vmatprep.subr.mxu0 0.0
        %478 = vmatpush1.msra.mxu0 0.0
        %479 = vmatprep.subr.mxu0 0.0
        %480 = vmatpush1.msra.mxu0 0.0
        %481 = vmatprep.subr.mxu0 0.0
        %482 = vmatpush1.msra.mxu0 0.0
        %483 = vmatprep.subr.mxu0 %v371
        %484 = vmatpush1.msra.mxu0 %v370
        %485 = vmatprep.subr.mxu0 0.0
        %486 = vmatpush2.msra.mxu0 0.0
        %487 = vmatprep.subr.mxu0 0.0
        %488 = vmatpush2.msra.mxu0 0.0
        %489 = vmatprep.subr.mxu0 0.0
        %490 = vmatpush2.msra.mxu0 0.0
        %491 = vmatprep.subr.mxu0 0.0
        %492 = vmatpush2.msra.mxu0 0.0
        %493 = vmatprep.subr.mxu0 0.0
        %494 = vmatpush2.msra.mxu0 0.0
        %495 = vmatprep.subr.mxu0 0.0
        %496 = vmatpush2.msra.mxu0 0.0
        %497 = vmatprep.subr.mxu0 0.0
        %498 = vmatpush2.msra.mxu0 0.0
        %499 = vmatprep.subr.mxu0 0.0
        %500 = vmatpush2.msra.mxu0 0.0
        %501 = vmatprep.subr.mxu0 0.0
        %502 = vmatpush2.msra.mxu0 0.0
        %503 = vmatprep.subr.mxu0 0.0
        %504 = vmatpush2.msra.mxu0 0.0
        %505 = vmatprep.subr.mxu0 0.0
        %506 = vmatpush2.msra.mxu0 0.0
        %507 = vmatprep.subr.mxu0 0.0
        %508 = vmatpush2.msra.mxu0 0.0
        %509 = vmatprep.subr.mxu0 0.0
        %510 = vmatpush2.msra.mxu0 0.0
        %511 = vmatprep.subr.mxu0 0.0
        %512 = vmatpush2.msra.mxu0 0.0
        %513 = vmatprep.subr.mxu0 0.0
        %514 = vmatpush2.msra.mxu0 0.0
        %515 = vmatprep.subr.mxu0 0.0
        %516 = vmatpush2.msra.mxu0 0.0
        %517 = vmatprep.mubr.f32.mxu0 0.0
        %518 = vmatmul.mubr.f32.gmra.mxu0 %v451
        %v519 = vpop.f32.mrf.mxu0
        %v520 = vadd.f32 %v446, %v519
        %v521 = vpop.f32.mrf.mxu0
        %v522 = vadd.f32 %v448, %v521
        %523 = vdwg.mxu0
        %v525 = vsel %vm375, %v369, 0
        %527 = vmatprep.subr.mxu0 0.0
        %528 = vmatpush1.msra.mxu0 0.0
        %529 = vmatprep.subr.mxu0 0.0
        %530 = vmatpush1.msra.mxu0 0.0
        %531 = vmatprep.subr.mxu0 0.0
        %532 = vmatpush1.msra.mxu0 0.0
        %533 = vmatprep.subr.mxu0 0.0
        %534 = vmatpush1.msra.mxu0 0.0
        %535 = vmatprep.subr.mxu0 0.0
        %536 = vmatpush1.msra.mxu0 0.0
        %537 = vmatprep.subr.mxu0 0.0
        %538 = vmatpush1.msra.mxu0 0.0
        %539 = vmatprep.subr.mxu0 0.0
        %540 = vmatpush1.msra.mxu0 0.0
        %541 = vmatprep.subr.mxu0 0.0
        %542 = vmatpush1.msra.mxu0 0.0
        %543 = vmatprep.subr.mxu0 0.0
        %544 = vmatpush1.msra.mxu0 0.0
        %545 = vmatprep.subr.mxu0 0.0
        %546 = vmatpush1.msra.mxu0 0.0
        %547 = vmatprep.subr.mxu0 0.0
        %548 = vmatpush1.msra.mxu0 0.0
        %549 = vmatprep.subr.mxu0 0.0
        %550 = vmatpush1.msra.mxu0 0.0
        %551 = vmatprep.subr.mxu0 0.0
        %552 = vmatpush1.msra.mxu0 0.0
        %553 = vmatprep.subr.mxu0 0.0
        %554 = vmatpush1.msra.mxu0 0.0
        %555 = vmatprep.subr.mxu0 0.0
        %556 = vmatpush1.msra.mxu0 0.0
        %557 = vmatprep.subr.mxu0 %v371
        %558 = vmatpush1.msra.mxu0 %v370
        %559 = vmatprep.subr.mxu0 0.0
        %560 = vmatpush2.msra.mxu0 0.0
        %561 = vmatprep.subr.mxu0 0.0
        %562 = vmatpush2.msra.mxu0 0.0
        %563 = vmatprep.subr.mxu0 0.0
        %564 = vmatpush2.msra.mxu0 0.0
        %565 = vmatprep.subr.mxu0 0.0
        %566 = vmatpush2.msra.mxu0 0.0
        %567 = vmatprep.subr.mxu0 0.0
        %568 = vmatpush2.msra.mxu0 0.0
        %569 = vmatprep.subr.mxu0 0.0
        %570 = vmatpush2.msra.mxu0 0.0
        %571 = vmatprep.subr.mxu0 0.0
        %572 = vmatpush2.msra.mxu0 0.0
        %573 = vmatprep.subr.mxu0 0.0
        %574 = vmatpush2.msra.mxu0 0.0
        %575 = vmatprep.subr.mxu0 0.0
        %576 = vmatpush2.msra.mxu0 0.0
        %577 = vmatprep.subr.mxu0 0.0
        %578 = vmatpush2.msra.mxu0 0.0
        %579 = vmatprep.subr.mxu0 0.0
        %580 = vmatpush2.msra.mxu0 0.0
        %581 = vmatprep.subr.mxu0 0.0
        %582 = vmatpush2.msra.mxu0 0.0
        %583 = vmatprep.subr.mxu0 0.0
        %584 = vmatpush2.msra.mxu0 0.0
        %585 = vmatprep.subr.mxu0 0.0
        %586 = vmatpush2.msra.mxu0 0.0
        %587 = vmatprep.subr.mxu0 0.0
        %588 = vmatpush2.msra.mxu0 0.0
        %589 = vmatprep.subr.mxu0 0.0
        %590 = vmatpush2.msra.mxu0 0.0
        %591 = vmatprep.mubr.f32.mxu0 0.0
        %592 = vmatmul.mubr.f32.gmra.mxu0 %v525
        %v593 = vpop.f32.mrf.mxu0
        %v594 = vadd.f32 0.0, %v593
        %v595 = vpop.f32.mrf.mxu0
        %v596 = vadd.f32 0.0, %v595
        %597 = vdwg.mxu0
        %v598 = vld [vmem:[%s3] sm:$0x3]
        %v600 = vlaneseq
        %v601 = vshrl.u32 %v600, 7
        %v602 = vsub.s32 0, %v601
        %v603 = vrot.slane %v598, %v602
        %v604 = vlaneseq
        %v605 = vshrl.u32 %v604, 7
        %v606 = vsub.s32 1, %v605
        %v607 = vrot.slane %v598, %v606
        %v610 = vmul.f32 %v603, %v520
        %v611 = vmul.f32 %v607, %v522
        %v612 = vld [vmem:[%s4] sm:$0x3]
        %v614 = vlaneseq
        %v615 = vshrl.u32 %v614, 7
        %v616 = vsub.s32 0, %v615
        %v617 = vrot.slane %v612, %v616
        %v618 = vlaneseq
        %v619 = vshrl.u32 %v618, 7
        %v620 = vsub.s32 1, %v619
        %v621 = vrot.slane %v612, %v620
        %v624 = vadd.f32 %v610, %v617
        %v625 = vadd.f32 %v611, %v621
        %v626 = vlaneseq
        %v627 = vshrl.u32 %v626, 7
        %v628 = vld [vmem:[#allocation2] sm:$0x3]
        %v629 = vld [vmem:[#allocation3] sm:$0xff]
        %v630 = vld [vmem:[#allocation3 + $0x8] sm:$0xff]
        %v631 = vld [vmem:[#allocation3 + $0x10] sm:$0xff]
        %v632 = vld [vmem:[#allocation3 + $0x18] sm:$0xff]
        %v633 = vld [vmem:[#allocation3 + $0x20] sm:$0xff]
        %v634 = vld [vmem:[#allocation3 + $0x28] sm:$0xff]
        %v635 = vld [vmem:[#allocation3 + $0x30] sm:$0xff]
        %v636 = vld [vmem:[#allocation3 + $0x38] sm:$0xff]
        %v637 = vld [vmem:[#allocation3 + $0x40] sm:$0xff]
        %v638 = vld [vmem:[#allocation3 + $0x48] sm:$0xff]
        %v639 = vld [vmem:[#allocation3 + $0x50] sm:$0xff]
        %v640 = vld [vmem:[#allocation3 + $0x58] sm:$0xff]
        %v641 = vld [vmem:[#allocation3 + $0x60] sm:$0xff]
        %v642 = vld [vmem:[#allocation3 + $0x68] sm:$0xff]
        %v643 = vld [vmem:[#allocation3 + $0x70] sm:$0xff]
        %v644 = vld [vmem:[#allocation3 + $0x78] sm:$0xff]
        %v645 = vld [vmem:[#allocation3 + $0x80] sm:$0xff]
        %v646 = vld [vmem:[#allocation3 + $0x88] sm:$0xff]
        %v647 = vld [vmem:[#allocation3 + $0x90] sm:$0xff]
        %v648 = vld [vmem:[#allocation3 + $0x98] sm:$0xff]
        %v649 = vld [vmem:[#allocation3 + $0xa0] sm:$0xff]
        %v650 = vld [vmem:[#allocation3 + $0xa8] sm:$0xff]
        %v651 = vld [vmem:[#allocation3 + $0xb0] sm:$0xff]
        %v652 = vld [vmem:[#allocation3 + $0xb8] sm:$0xff]
        %v653 = vld [vmem:[#allocation3 + $0xc0] sm:$0xff]
        %v654 = vld [vmem:[#allocation3 + $0xc8] sm:$0xff]
        %v655 = vld [vmem:[#allocation3 + $0xd0] sm:$0xff]
        %v656 = vld [vmem:[#allocation3 + $0xd8] sm:$0xff]
        %v657 = vld [vmem:[#allocation3 + $0xe0] sm:$0xff]
        %v658 = vld [vmem:[#allocation3 + $0xe8] sm:$0xff]
        %v659 = vld [vmem:[#allocation3 + $0xf0] sm:$0xff]
        %v660 = vld [vmem:[#allocation3 + $0xf8] sm:$0xff]
        %v661 = vld [vmem:[#allocation3 + $0x100] sm:$0xff]
        %v662 = vld [vmem:[#allocation3 + $0x108] sm:$0xff]
        %v663 = vld [vmem:[#allocation3 + $0x110] sm:$0xff]
        %v664 = vld [vmem:[#allocation3 + $0x118] sm:$0xff]
        %v665 = vld [vmem:[#allocation3 + $0x120] sm:$0xff]
        %v666 = vld [vmem:[#allocation3 + $0x128] sm:$0xff]
        %v667 = vld [vmem:[#allocation3 + $0x130] sm:$0xff]
        %v668 = vld [vmem:[#allocation3 + $0x138] sm:$0xff]
        %v669 = vld [vmem:[#allocation3 + $0x140] sm:$0xff]
        %v670 = vld [vmem:[#allocation3 + $0x148] sm:$0xff]
        %v671 = vld [vmem:[#allocation3 + $0x150] sm:$0xff]
        %v672 = vld [vmem:[#allocation3 + $0x158] sm:$0xff]
        %v673 = vld [vmem:[#allocation3 + $0x160] sm:$0xff]
        %v674 = vld [vmem:[#allocation3 + $0x168] sm:$0xff]
        %v675 = vld [vmem:[#allocation3 + $0x170] sm:$0xff]
        %v676 = vld [vmem:[#allocation3 + $0x178] sm:$0xff]
        %v677 = vld [vmem:[#allocation3 + $0x180] sm:$0xff]
        %v678 = vld [vmem:[#allocation3 + $0x188] sm:$0xff]
        %v679 = vld [vmem:[#allocation3 + $0x190] sm:$0xff]
        %v680 = vld [vmem:[#allocation3 + $0x198] sm:$0xff]
        %v681 = vld [vmem:[#allocation3 + $0x1a0] sm:$0xff]
        %v682 = vld [vmem:[#allocation3 + $0x1a8] sm:$0xff]
        %v683 = vld [vmem:[#allocation3 + $0x1b0] sm:$0xff]
        %v684 = vld [vmem:[#allocation3 + $0x1b8] sm:$0xff]
        %v685 = vld [vmem:[#allocation3 + $0x1c0] sm:$0xff]
        %v686 = vld [vmem:[#allocation3 + $0x1c8] sm:$0xff]
        %v687 = vld [vmem:[#allocation3 + $0x1d0] sm:$0xff]
        %v688 = vld [vmem:[#allocation3 + $0x1d8] sm:$0xff]
        %v689 = vld [vmem:[#allocation3 + $0x1e0] sm:$0xff]
        %v690 = vld [vmem:[#allocation3 + $0x1e8] sm:$0xff]
        %v691 = vld [vmem:[#allocation3 + $0x1f0] sm:$0xff]
        %v692 = vld [vmem:[#allocation3 + $0x1f8] sm:$0xff]
        %v694 = vlaneseq
        %v695 = vshrl.u32 %v694, 7
        %v696 = vsub.s32 0, %v695
        %v697 = vrot.slane %v628, %v696
        %v698 = vlaneseq
        %v699 = vshrl.u32 %v698, 7
        %v700 = vsub.s32 1, %v699
        %v701 = vrot.slane %v628, %v700
        %704 = vmatprep.subr.mxu0 %v660
        %705 = vmatpush1.msra.mxu0 %v659
        %706 = vmatprep.subr.mxu0 %v658
        %707 = vmatpush1.msra.mxu0 %v657
        %708 = vmatprep.subr.mxu0 %v656
        %709 = vmatpush1.msra.mxu0 %v655
        %710 = vmatprep.subr.mxu0 %v654
        %711 = vmatpush1.msra.mxu0 %v653
        %712 = vmatprep.subr.mxu0 %v652
        %713 = vmatpush1.msra.mxu0 %v651
        %714 = vmatprep.subr.mxu0 %v650
        %715 = vmatpush1.msra.mxu0 %v649
        %716 = vmatprep.subr.mxu0 %v648
        %717 = vmatpush1.msra.mxu0 %v647
        %718 = vmatprep.subr.mxu0 %v646
        %719 = vmatpush1.msra.mxu0 %v645
        %720 = vmatprep.subr.mxu0 %v644
        %721 = vmatpush1.msra.mxu0 %v643
        %722 = vmatprep.subr.mxu0 %v642
        %723 = vmatpush1.msra.mxu0 %v641
        %724 = vmatprep.subr.mxu0 %v640
        %725 = vmatpush1.msra.mxu0 %v639
        %726 = vmatprep.subr.mxu0 %v638
        %727 = vmatpush1.msra.mxu0 %v637
        %728 = vmatprep.subr.mxu0 %v636
        %729 = vmatpush1.msra.mxu0 %v635
        %730 = vmatprep.subr.mxu0 %v634
        %731 = vmatpush1.msra.mxu0 %v633
        %732 = vmatprep.subr.mxu0 %v632
        %733 = vmatpush1.msra.mxu0 %v631
        %734 = vmatprep.subr.mxu0 %v630
        %735 = vmatpush1.msra.mxu0 %v629
        %736 = vmatprep.subr.mxu0 %v692
        %737 = vmatpush2.msra.mxu0 %v691
        %738 = vmatprep.subr.mxu0 %v690
        %739 = vmatpush2.msra.mxu0 %v689
        %740 = vmatprep.subr.mxu0 %v688
        %741 = vmatpush2.msra.mxu0 %v687
        %742 = vmatprep.subr.mxu0 %v686
        %743 = vmatpush2.msra.mxu0 %v685
        %744 = vmatprep.subr.mxu0 %v684
        %745 = vmatpush2.msra.mxu0 %v683
        %746 = vmatprep.subr.mxu0 %v682
        %747 = vmatpush2.msra.mxu0 %v681
        %748 = vmatprep.subr.mxu0 %v680
        %749 = vmatpush2.msra.mxu0 %v679
        %750 = vmatprep.subr.mxu0 %v678
        %751 = vmatpush2.msra.mxu0 %v677
        %752 = vmatprep.subr.mxu0 %v676
        %753 = vmatpush2.msra.mxu0 %v675
        %754 = vmatprep.subr.mxu0 %v674
        %755 = vmatpush2.msra.mxu0 %v673
        %756 = vmatprep.subr.mxu0 %v672
        %757 = vmatpush2.msra.mxu0 %v671
        %758 = vmatprep.subr.mxu0 %v670
        %759 = vmatpush2.msra.mxu0 %v669
        %760 = vmatprep.subr.mxu0 %v668
        %761 = vmatpush2.msra.mxu0 %v667
        %762 = vmatprep.subr.mxu0 %v666
        %763 = vmatpush2.msra.mxu0 %v665
        %764 = vmatprep.subr.mxu0 %v664
        %765 = vmatpush2.msra.mxu0 %v663
        %766 = vmatprep.subr.mxu0 %v662
        %767 = vmatpush2.msra.mxu0 %v661
        %768 = vmatprep.mubr.f32.mxu0 %v701
        %769 = vmatmul.mubr.f32.gmra.mxu0 %v697
        %v770 = vpop.f32.mrf.mxu0
        %v771 = vadd.f32 0.0, %v770
        %v772 = vpop.f32.mrf.mxu0
        %v773 = vadd.f32 0.0, %v772
        %774 = vdwg.mxu0
        %v775 = vadd.f32 %v624, %v771
        %v776 = vadd.f32 %v625, %v773
        %v777 = vtanh.pop %v775
        %v778 = vtanh.pop %v776
        %vm779 = vcmp.gt.f32.partialorder %v594, 0.0
        %vm780 = vcmp.gt.f32.partialorder %v596, 0.0
        %v781 = vsel %vm779, %v777, %v697
        %v782 = vsel %vm780, %v778, %v701
        %vm783 = vcmp.eq.s32.totalorder %v627, 0
        %v784 = vmul.f32 %v594, %v781
        %v785 = vmul.f32 %v596, %v782
        %v786 = vsel %vm783, 1, 0
        %vm787 = vcmp.eq.s32.totalorder %v786, 1
        %v788 = vlaneseq
        %v789 = vshrl.u32 %v788, 7
        %v790 = vsub.s32 0, %v789
        %v791 = vrot.slane %v784, %v790
        %v792 = vlaneseq
        %v793 = vshrl.u32 %v792, 7
        %v794 = vsub.s32 0, %v793
        %v795 = vrot.slane %v785, %v794
        %v796 = vsel %vm787, %v791, 0.0
        %v797 = vsel %vm787, %v795, 0.0
        %v798 = vadd.f32 %v796, 0.0
        %v799 = vadd.f32 %v797, 0.0
        %800 = vmatprep.subr.mxu0 %v660
        %801 = vmatpush1.msra.mxu0 %v659
        %802 = vmatprep.subr.mxu0 %v658
        %803 = vmatpush1.msra.mxu0 %v657
        %804 = vmatprep.subr.mxu0 %v656
        %805 = vmatpush1.msra.mxu0 %v655
        %806 = vmatprep.subr.mxu0 %v654
        %807 = vmatpush1.msra.mxu0 %v653
        %808 = vmatprep.subr.mxu0 %v652
        %809 = vmatpush1.msra.mxu0 %v651
        %810 = vmatprep.subr.mxu0 %v650
        %811 = vmatpush1.msra.mxu0 %v649
        %812 = vmatprep.subr.mxu0 %v648
        %813 = vmatpush1.msra.mxu0 %v647
        %814 = vmatprep.subr.mxu0 %v646
        %815 = vmatpush1.msra.mxu0 %v645
        %816 = vmatprep.subr.mxu0 %v644
        %817 = vmatpush1.msra.mxu0 %v643
        %818 = vmatprep.subr.mxu0 %v642
        %819 = vmatpush1.msra.mxu0 %v641
        %820 = vmatprep.subr.mxu0 %v640
        %821 = vmatpush1.msra.mxu0 %v639
        %822 = vmatprep.subr.mxu0 %v638
        %823 = vmatpush1.msra.mxu0 %v637
        %824 = vmatprep.subr.mxu0 %v636
        %825 = vmatpush1.msra.mxu0 %v635
        %826 = vmatprep.subr.mxu0 %v634
        %827 = vmatpush1.msra.mxu0 %v633
        %828 = vmatprep.subr.mxu0 %v632
        %829 = vmatpush1.msra.mxu0 %v631
        %830 = vmatprep.subr.mxu0 %v630
        %831 = vmatpush1.msra.mxu0 %v629
        %832 = vmatprep.subr.mxu0 %v692
        %833 = vmatpush2.msra.mxu0 %v691
        %834 = vmatprep.subr.mxu0 %v690
        %835 = vmatpush2.msra.mxu0 %v689
        %836 = vmatprep.subr.mxu0 %v688
        %837 = vmatpush2.msra.mxu0 %v687
        %838 = vmatprep.subr.mxu0 %v686
        %839 = vmatpush2.msra.mxu0 %v685
        %840 = vmatprep.subr.mxu0 %v684
        %841 = vmatpush2.msra.mxu0 %v683
        %842 = vmatprep.subr.mxu0 %v682
        %843 = vmatpush2.msra.mxu0 %v681
        %844 = vmatprep.subr.mxu0 %v680
        %845 = vmatpush2.msra.mxu0 %v679
        %846 = vmatprep.subr.mxu0 %v678
        %847 = vmatpush2.msra.mxu0 %v677
        %848 = vmatprep.subr.mxu0 %v676
        %849 = vmatpush2.msra.mxu0 %v675
        %850 = vmatprep.subr.mxu0 %v674
        %851 = vmatpush2.msra.mxu0 %v673
        %852 = vmatprep.subr.mxu0 %v672
        %853 = vmatpush2.msra.mxu0 %v671
        %854 = vmatprep.subr.mxu0 %v670
        %855 = vmatpush2.msra.mxu0 %v669
        %856 = vmatprep.subr.mxu0 %v668
        %857 = vmatpush2.msra.mxu0 %v667
        %858 = vmatprep.subr.mxu0 %v666
        %859 = vmatpush2.msra.mxu0 %v665
        %860 = vmatprep.subr.mxu0 %v664
        %861 = vmatpush2.msra.mxu0 %v663
        %862 = vmatprep.subr.mxu0 %v662
        %863 = vmatpush2.msra.mxu0 %v661
        %864 = vmatprep.mubr.f32.mxu0 %v782
        %865 = vmatmul.mubr.f32.gmra.mxu0 %v781
        %v866 = vpop.f32.mrf.mxu0
        %v867 = vadd.f32 0.0, %v866
        %v868 = vpop.f32.mrf.mxu0
        %v869 = vadd.f32 0.0, %v868
        %870 = vdwg.mxu0
        %v873 = vrot.slane %v867, 7
        %v874 = vrot.slane %v869, 7
        %v877 = vadd.f32 %v624, %v873
        %v878 = vadd.f32 %v625, %v874
        %v879 = vtanh.pop %v877
        %v880 = vtanh.pop %v878
        %v883 = vrot.slane %v781, 7
        %v884 = vrot.slane %v782, 7
        %v887 = vsel %vm779, %v879, %v883
        %v888 = vsel %vm780, %v880, %v884
        %vm889 = vcmp.eq.s32.totalorder %v627, 1
        %v890 = vmul.f32 %v594, %v887
        %v891 = vmul.f32 %v596, %v888
        %v892 = vsel %vm889, 1, 0
        %vm893 = vcmp.eq.s32.totalorder %v892, 1
        %v894 = vlaneseq
        %v895 = vshrl.u32 %v894, 7
        %v896 = vsub.s32 1, %v895
        %v897 = vrot.slane %v890, %v896
        %v898 = vlaneseq
        %v899 = vshrl.u32 %v898, 7
        %v900 = vsub.s32 1, %v899
        %v901 = vrot.slane %v891, %v900
        %v902 = vsel %vm893, %v897, 0.0
        %v903 = vsel %vm893, %v901, 0.0
        %v904 = vadd.f32 %v798, %v902
        %v905 = vadd.f32 %v799, %v903
        %v908 = vrot.slane %v887, 1
        %v909 = vrot.slane %v888, 1
        %912 = vmatprep.subr.mxu0 %v660
        %913 = vmatpush1.msra.mxu0 %v659
        %914 = vmatprep.subr.mxu0 %v658
        %915 = vmatpush1.msra.mxu0 %v657
        %916 = vmatprep.subr.mxu0 %v656
        %917 = vmatpush1.msra.mxu0 %v655
        %918 = vmatprep.subr.mxu0 %v654
        %919 = vmatpush1.msra.mxu0 %v653
        %920 = vmatprep.subr.mxu0 %v652
        %921 = vmatpush1.msra.mxu0 %v651
        %922 = vmatprep.subr.mxu0 %v650
        %923 = vmatpush1.msra.mxu0 %v649
        %924 = vmatprep.subr.mxu0 %v648
        %925 = vmatpush1.msra.mxu0 %v647
        %926 = vmatprep.subr.mxu0 %v646
        %927 = vmatpush1.msra.mxu0 %v645
        %928 = vmatprep.subr.mxu0 %v644
        %929 = vmatpush1.msra.mxu0 %v643
        %930 = vmatprep.subr.mxu0 %v642
        %931 = vmatpush1.msra.mxu0 %v641
        %932 = vmatprep.subr.mxu0 %v640
        %933 = vmatpush1.msra.mxu0 %v639
        %934 = vmatprep.subr.mxu0 %v638
        %935 = vmatpush1.msra.mxu0 %v637
        %936 = vmatprep.subr.mxu0 %v636
        %937 = vmatpush1.msra.mxu0 %v635
        %938 = vmatprep.subr.mxu0 %v634
        %939 = vmatpush1.msra.mxu0 %v633
        %940 = vmatprep.subr.mxu0 %v632
        %941 = vmatpush1.msra.mxu0 %v631
        %942 = vmatprep.subr.mxu0 %v630
        %943 = vmatpush1.msra.mxu0 %v629
        %944 = vmatprep.subr.mxu0 %v692
        %945 = vmatpush2.msra.mxu0 %v691
        %946 = vmatprep.subr.mxu0 %v690
        %947 = vmatpush2.msra.mxu0 %v689
        %948 = vmatprep.subr.mxu0 %v688
        %949 = vmatpush2.msra.mxu0 %v687
        %950 = vmatprep.subr.mxu0 %v686
        %951 = vmatpush2.msra.mxu0 %v685
        %952 = vmatprep.subr.mxu0 %v684
        %953 = vmatpush2.msra.mxu0 %v683
        %954 = vmatprep.subr.mxu0 %v682
        %955 = vmatpush2.msra.mxu0 %v681
        %956 = vmatprep.subr.mxu0 %v680
        %957 = vmatpush2.msra.mxu0 %v679
        %958 = vmatprep.subr.mxu0 %v678
        %959 = vmatpush2.msra.mxu0 %v677
        %960 = vmatprep.subr.mxu0 %v676
        %961 = vmatpush2.msra.mxu0 %v675
        %962 = vmatprep.subr.mxu0 %v674
        %963 = vmatpush2.msra.mxu0 %v673
        %964 = vmatprep.subr.mxu0 %v672
        %965 = vmatpush2.msra.mxu0 %v671
        %966 = vmatprep.subr.mxu0 %v670
        %967 = vmatpush2.msra.mxu0 %v669
        %968 = vmatprep.subr.mxu0 %v668
        %969 = vmatpush2.msra.mxu0 %v667
        %970 = vmatprep.subr.mxu0 %v666
        %971 = vmatpush2.msra.mxu0 %v665
        %972 = vmatprep.subr.mxu0 %v664
        %973 = vmatpush2.msra.mxu0 %v663
        %974 = vmatprep.subr.mxu0 %v662
        %975 = vmatpush2.msra.mxu0 %v661
        %976 = vmatprep.mubr.f32.mxu0 %v909
        %977 = vmatmul.mubr.f32.gmra.mxu0 %v908
        %v978 = vpop.f32.mrf.mxu0
        %v979 = vadd.f32 0.0, %v978
        %v980 = vpop.f32.mrf.mxu0
        %v981 = vadd.f32 0.0, %v980
        %982 = vdwg.mxu0
        %v985 = vrot.slane %v979, 6
        %v986 = vrot.slane %v981, 6
        %v989 = vadd.f32 %v624, %v985
        %v990 = vadd.f32 %v625, %v986
        %v991 = vtanh.pop %v989
        %v992 = vtanh.pop %v990
        %v993 = vrot.slane %v887, 7
        %v994 = vrot.slane %v888, 7
        %v997 = vsel %vm779, %v991, %v993
        %v998 = vsel %vm780, %v992, %v994
        %vm999 = vcmp.eq.s32.totalorder %v627, 2
        %v1000 = vmul.f32 %v594, %v997
        %v1001 = vmul.f32 %v596, %v998
        %v1002 = vsel %vm999, 1, 0
        %vm1003 = vcmp.eq.s32.totalorder %v1002, 1
        %v1004 = vlaneseq
        %v1005 = vshrl.u32 %v1004, 7
        %v1006 = vsub.s32 2, %v1005
        %v1007 = vrot.slane %v1000, %v1006
        %v1008 = vlaneseq
        %v1009 = vshrl.u32 %v1008, 7
        %v1010 = vsub.s32 2, %v1009
        %v1011 = vrot.slane %v1001, %v1010
        %v1012 = vsel %vm1003, %v1007, 0.0
        %v1013 = vsel %vm1003, %v1011, 0.0
        %v1014 = vadd.f32 %v904, %v1012
        %v1015 = vadd.f32 %v905, %v1013
        %v1018 = vrot.slane %v997, 2
        %v1019 = vrot.slane %v998, 2
        %1022 = vmatprep.subr.mxu0 %v660
        %1023 = vmatpush1.msra.mxu0 %v659
        %1024 = vmatprep.subr.mxu0 %v658
        %1025 = vmatpush1.msra.mxu0 %v657
        %1026 = vmatprep.subr.mxu0 %v656
        %1027 = vmatpush1.msra.mxu0 %v655
        %1028 = vmatprep.subr.mxu0 %v654
        %1029 = vmatpush1.msra.mxu0 %v653
        %1030 = vmatprep.subr.mxu0 %v652
        %1031 = vmatpush1.msra.mxu0 %v651
        %1032 = vmatprep.subr.mxu0 %v650
        %1033 = vmatpush1.msra.mxu0 %v649
        %1034 = vmatprep.subr.mxu0 %v648
        %1035 = vmatpush1.msra.mxu0 %v647
        %1036 = vmatprep.subr.mxu0 %v646
        %1037 = vmatpush1.msra.mxu0 %v645
        %1038 = vmatprep.subr.mxu0 %v644
        %1039 = vmatpush1.msra.mxu0 %v643
        %1040 = vmatprep.subr.mxu0 %v642
        %1041 = vmatpush1.msra.mxu0 %v641
        %1042 = vmatprep.subr.mxu0 %v640
        %1043 = vmatpush1.msra.mxu0 %v639
        %1044 = vmatprep.subr.mxu0 %v638
        %1045 = vmatpush1.msra.mxu0 %v637
        %1046 = vmatprep.subr.mxu0 %v636
        %1047 = vmatpush1.msra.mxu0 %v635
        %1048 = vmatprep.subr.mxu0 %v634
        %1049 = vmatpush1.msra.mxu0 %v633
        %1050 = vmatprep.subr.mxu0 %v632
        %1051 = vmatpush1.msra.mxu0 %v631
        %1052 = vmatprep.subr.mxu0 %v630
        %1053 = vmatpush1.msra.mxu0 %v629
        %1054 = vmatprep.subr.mxu0 %v692
        %1055 = vmatpush2.msra.mxu0 %v691
        %1056 = vmatprep.subr.mxu0 %v690
        %1057 = vmatpush2.msra.mxu0 %v689
        %1058 = vmatprep.subr.mxu0 %v688
        %1059 = vmatpush2.msra.mxu0 %v687
        %1060 = vmatprep.subr.mxu0 %v686
        %1061 = vmatpush2.msra.mxu0 %v685
        %1062 = vmatprep.subr.mxu0 %v684
        %1063 = vmatpush2.msra.mxu0 %v683
        %1064 = vmatprep.subr.mxu0 %v682
        %1065 = vmatpush2.msra.mxu0 %v681
        %1066 = vmatprep.subr.mxu0 %v680
        %1067 = vmatpush2.msra.mxu0 %v679
        %1068 = vmatprep.subr.mxu0 %v678
        %1069 = vmatpush2.msra.mxu0 %v677
        %1070 = vmatprep.subr.mxu0 %v676
        %1071 = vmatpush2.msra.mxu0 %v675
        %1072 = vmatprep.subr.mxu0 %v674
        %1073 = vmatpush2.msra.mxu0 %v673
        %1074 = vmatprep.subr.mxu0 %v672
        %1075 = vmatpush2.msra.mxu0 %v671
        %1076 = vmatprep.subr.mxu0 %v670
        %1077 = vmatpush2.msra.mxu0 %v669
        %1078 = vmatprep.subr.mxu0 %v668
        %1079 = vmatpush2.msra.mxu0 %v667
        %1080 = vmatprep.subr.mxu0 %v666
        %1081 = vmatpush2.msra.mxu0 %v665
        %1082 = vmatprep.subr.mxu0 %v664
        %1083 = vmatpush2.msra.mxu0 %v663
        %1084 = vmatprep.subr.mxu0 %v662
        %1085 = vmatpush2.msra.mxu0 %v661
        %1086 = vmatprep.mubr.f32.mxu0 %v1019
        %1087 = vmatmul.mubr.f32.gmra.mxu0 %v1018
        %v1088 = vpop.f32.mrf.mxu0
        %v1089 = vadd.f32 0.0, %v1088
        %v1090 = vpop.f32.mrf.mxu0
        %v1091 = vadd.f32 0.0, %v1090
        %1092 = vdwg.mxu0
        %v1095 = vrot.slane %v1089, 5
        %v1096 = vrot.slane %v1091, 5
        %v1099 = vadd.f32 %v624, %v1095
        %v1100 = vadd.f32 %v625, %v1096
        %v1101 = vtanh.pop %v1099
        %v1102 = vtanh.pop %v1100
        %v1103 = vrot.slane %v997, 7
        %v1104 = vrot.slane %v998, 7
        %v1107 = vsel %vm779, %v1101, %v1103
        %v1108 = vsel %vm780, %v1102, %v1104
        %vm1109 = vcmp.eq.s32.totalorder %v627, 3
        %v1110 = vmul.f32 %v594, %v1107
        %v1111 = vmul.f32 %v596, %v1108
        %v1112 = vsel %vm1109, 1, 0
        %vm1113 = vcmp.eq.s32.totalorder %v1112, 1
        %v1114 = vlaneseq
        %v1115 = vshrl.u32 %v1114, 7
        %v1116 = vsub.s32 3, %v1115
        %v1117 = vrot.slane %v1110, %v1116
        %v1118 = vlaneseq
        %v1119 = vshrl.u32 %v1118, 7
        %v1120 = vsub.s32 3, %v1119
        %v1121 = vrot.slane %v1111, %v1120
        %v1122 = vsel %vm1113, %v1117, 0.0
        %v1123 = vsel %vm1113, %v1121, 0.0
        %v1124 = vadd.f32 %v1014, %v1122
        %v1125 = vadd.f32 %v1015, %v1123
        %v1128 = vrot.slane %v1107, 3
        %v1129 = vrot.slane %v1108, 3
        %1132 = vmatprep.subr.mxu0 %v660
        %1133 = vmatpush1.msra.mxu0 %v659
        %1134 = vmatprep.subr.mxu0 %v658
        %1135 = vmatpush1.msra.mxu0 %v657
        %1136 = vmatprep.subr.mxu0 %v656
        %1137 = vmatpush1.msra.mxu0 %v655
        %1138 = vmatprep.subr.mxu0 %v654
        %1139 = vmatpush1.msra.mxu0 %v653
        %1140 = vmatprep.subr.mxu0 %v652
        %1141 = vmatpush1.msra.mxu0 %v651
        %1142 = vmatprep.subr.mxu0 %v650
        %1143 = vmatpush1.msra.mxu0 %v649
        %1144 = vmatprep.subr.mxu0 %v648
        %1145 = vmatpush1.msra.mxu0 %v647
        %1146 = vmatprep.subr.mxu0 %v646
        %1147 = vmatpush1.msra.mxu0 %v645
        %1148 = vmatprep.subr.mxu0 %v644
        %1149 = vmatpush1.msra.mxu0 %v643
        %1150 = vmatprep.subr.mxu0 %v642
        %1151 = vmatpush1.msra.mxu0 %v641
        %1152 = vmatprep.subr.mxu0 %v640
        %1153 = vmatpush1.msra.mxu0 %v639
        %1154 = vmatprep.subr.mxu0 %v638
        %1155 = vmatpush1.msra.mxu0 %v637
        %1156 = vmatprep.subr.mxu0 %v636
        %1157 = vmatpush1.msra.mxu0 %v635
        %1158 = vmatprep.subr.mxu0 %v634
        %1159 = vmatpush1.msra.mxu0 %v633
        %1160 = vmatprep.subr.mxu0 %v632
        %1161 = vmatpush1.msra.mxu0 %v631
        %1162 = vmatprep.subr.mxu0 %v630
        %1163 = vmatpush1.msra.mxu0 %v629
        %1164 = vmatprep.subr.mxu0 %v692
        %1165 = vmatpush2.msra.mxu0 %v691
        %1166 = vmatprep.subr.mxu0 %v690
        %1167 = vmatpush2.msra.mxu0 %v689
        %1168 = vmatprep.subr.mxu0 %v688
        %1169 = vmatpush2.msra.mxu0 %v687
        %1170 = vmatprep.subr.mxu0 %v686
        %1171 = vmatpush2.msra.mxu0 %v685
        %1172 = vmatprep.subr.mxu0 %v684
        %1173 = vmatpush2.msra.mxu0 %v683
        %1174 = vmatprep.subr.mxu0 %v682
        %1175 = vmatpush2.msra.mxu0 %v681
        %1176 = vmatprep.subr.mxu0 %v680
        %1177 = vmatpush2.msra.mxu0 %v679
        %1178 = vmatprep.subr.mxu0 %v678
        %1179 = vmatpush2.msra.mxu0 %v677
        %1180 = vmatprep.subr.mxu0 %v676
        %1181 = vmatpush2.msra.mxu0 %v675
        %1182 = vmatprep.subr.mxu0 %v674
        %1183 = vmatpush2.msra.mxu0 %v673
        %1184 = vmatprep.subr.mxu0 %v672
        %1185 = vmatpush2.msra.mxu0 %v671
        %1186 = vmatprep.subr.mxu0 %v670
        %1187 = vmatpush2.msra.mxu0 %v669
        %1188 = vmatprep.subr.mxu0 %v668
        %1189 = vmatpush2.msra.mxu0 %v667
        %1190 = vmatprep.subr.mxu0 %v666
        %1191 = vmatpush2.msra.mxu0 %v665
        %1192 = vmatprep.subr.mxu0 %v664
        %1193 = vmatpush2.msra.mxu0 %v663
        %1194 = vmatprep.subr.mxu0 %v662
        %1195 = vmatpush2.msra.mxu0 %v661
        %1196 = vmatprep.mubr.f32.mxu0 %v1129
        %1197 = vmatmul.mubr.f32.gmra.mxu0 %v1128
        %v1198 = vpop.f32.mrf.mxu0
        %v1199 = vadd.f32 0.0, %v1198
        %v1200 = vpop.f32.mrf.mxu0
        %v1201 = vadd.f32 0.0, %v1200
        %1202 = vdwg.mxu0
        %v1205 = vrot.slane %v1199, 4
        %v1206 = vrot.slane %v1201, 4
        %v1209 = vadd.f32 %v624, %v1205
        %v1210 = vadd.f32 %v625, %v1206
        %v1211 = vtanh.pop %v1209
        %v1212 = vtanh.pop %v1210
        %v1213 = vrot.slane %v1107, 7
        %v1214 = vrot.slane %v1108, 7
        %v1217 = vsel %vm779, %v1211, %v1213
        %v1218 = vsel %vm780, %v1212, %v1214
        %vm1219 = vcmp.eq.s32.totalorder %v627, 4
        %v1220 = vmul.f32 %v594, %v1217
        %v1221 = vmul.f32 %v596, %v1218
        %v1222 = vsel %vm1219, 1, 0
        %vm1223 = vcmp.eq.s32.totalorder %v1222, 1
        %v1224 = vlaneseq
        %v1225 = vshrl.u32 %v1224, 7
        %v1226 = vsub.s32 4, %v1225
        %v1227 = vrot.slane %v1220, %v1226
        %v1228 = vlaneseq
        %v1229 = vshrl.u32 %v1228, 7
        %v1230 = vsub.s32 4, %v1229
        %v1231 = vrot.slane %v1221, %v1230
        %v1232 = vsel %vm1223, %v1227, 0.0
        %v1233 = vsel %vm1223, %v1231, 0.0
        %v1234 = vadd.f32 %v1124, %v1232
        %v1235 = vadd.f32 %v1125, %v1233
        %v1238 = vrot.slane %v1217, 4
        %v1239 = vrot.slane %v1218, 4
        %1242 = vmatprep.subr.mxu0 %v660
        %1243 = vmatpush1.msra.mxu0 %v659
        %1244 = vmatprep.subr.mxu0 %v658
        %1245 = vmatpush1.msra.mxu0 %v657
        %1246 = vmatprep.subr.mxu0 %v656
        %1247 = vmatpush1.msra.mxu0 %v655
        %1248 = vmatprep.subr.mxu0 %v654
        %1249 = vmatpush1.msra.mxu0 %v653
        %1250 = vmatprep.subr.mxu0 %v652
        %1251 = vmatpush1.msra.mxu0 %v651
        %1252 = vmatprep.subr.mxu0 %v650
        %1253 = vmatpush1.msra.mxu0 %v649
        %1254 = vmatprep.subr.mxu0 %v648
        %1255 = vmatpush1.msra.mxu0 %v647
        %1256 = vmatprep.subr.mxu0 %v646
        %1257 = vmatpush1.msra.mxu0 %v645
        %1258 = vmatprep.subr.mxu0 %v644
        %1259 = vmatpush1.msra.mxu0 %v643
        %1260 = vmatprep.subr.mxu0 %v642
        %1261 = vmatpush1.msra.mxu0 %v641
        %1262 = vmatprep.subr.mxu0 %v640
        %1263 = vmatpush1.msra.mxu0 %v639
        %1264 = vmatprep.subr.mxu0 %v638
        %1265 = vmatpush1.msra.mxu0 %v637
        %1266 = vmatprep.subr.mxu0 %v636
        %1267 = vmatpush1.msra.mxu0 %v635
        %1268 = vmatprep.subr.mxu0 %v634
        %1269 = vmatpush1.msra.mxu0 %v633
        %1270 = vmatprep.subr.mxu0 %v632
        %1271 = vmatpush1.msra.mxu0 %v631
        %1272 = vmatprep.subr.mxu0 %v630
        %1273 = vmatpush1.msra.mxu0 %v629
        %1274 = vmatprep.subr.mxu0 %v692
        %1275 = vmatpush2.msra.mxu0 %v691
        %1276 = vmatprep.subr.mxu0 %v690
        %1277 = vmatpush2.msra.mxu0 %v689
        %1278 = vmatprep.subr.mxu0 %v688
        %1279 = vmatpush2.msra.mxu0 %v687
        %1280 = vmatprep.subr.mxu0 %v686
        %1281 = vmatpush2.msra.mxu0 %v685
        %1282 = vmatprep.subr.mxu0 %v684
        %1283 = vmatpush2.msra.mxu0 %v683
        %1284 = vmatprep.subr.mxu0 %v682
        %1285 = vmatpush2.msra.mxu0 %v681
        %1286 = vmatprep.subr.mxu0 %v680
        %1287 = vmatpush2.msra.mxu0 %v679
        %1288 = vmatprep.subr.mxu0 %v678
        %1289 = vmatpush2.msra.mxu0 %v677
        %1290 = vmatprep.subr.mxu0 %v676
        %1291 = vmatpush2.msra.mxu0 %v675
        %1292 = vmatprep.subr.mxu0 %v674
        %1293 = vmatpush2.msra.mxu0 %v673
        %1294 = vmatprep.subr.mxu0 %v672
        %1295 = vmatpush2.msra.mxu0 %v671
        %1296 = vmatprep.subr.mxu0 %v670
        %1297 = vmatpush2.msra.mxu0 %v669
        %1298 = vmatprep.subr.mxu0 %v668
        %1299 = vmatpush2.msra.mxu0 %v667
        %1300 = vmatprep.subr.mxu0 %v666
        %1301 = vmatpush2.msra.mxu0 %v665
        %1302 = vmatprep.subr.mxu0 %v664
        %1303 = vmatpush2.msra.mxu0 %v663
        %1304 = vmatprep.subr.mxu0 %v662
        %1305 = vmatpush2.msra.mxu0 %v661
        %1306 = vmatprep.mubr.f32.mxu0 %v1239
        %1307 = vmatmul.mubr.f32.gmra.mxu0 %v1238
        %v1308 = vpop.f32.mrf.mxu0
        %v1309 = vadd.f32 0.0, %v1308
        %v1310 = vpop.f32.mrf.mxu0
        %v1311 = vadd.f32 0.0, %v1310
        %1312 = vdwg.mxu0
        %v1315 = vrot.slane %v1309, 3
        %v1316 = vrot.slane %v1311, 3
        %v1319 = vadd.f32 %v624, %v1315
        %v1320 = vadd.f32 %v625, %v1316
        %v1321 = vtanh.pop %v1319
        %v1322 = vtanh.pop %v1320
        %v1323 = vrot.slane %v1217, 7
        %v1324 = vrot.slane %v1218, 7
        %v1327 = vsel %vm779, %v1321, %v1323
        %v1328 = vsel %vm780, %v1322, %v1324
        %vm1329 = vcmp.eq.s32.totalorder %v627, 5
        %v1330 = vmul.f32 %v594, %v1327
        %v1331 = vmul.f32 %v596, %v1328
        %v1332 = vsel %vm1329, 1, 0
        %vm1333 = vcmp.eq.s32.totalorder %v1332, 1
        %v1334 = vlaneseq
        %v1335 = vshrl.u32 %v1334, 7
        %v1336 = vsub.s32 5, %v1335
        %v1337 = vrot.slane %v1330, %v1336
        %v1338 = vlaneseq
        %v1339 = vshrl.u32 %v1338, 7
        %v1340 = vsub.s32 5, %v1339
        %v1341 = vrot.slane %v1331, %v1340
        %v1342 = vsel %vm1333, %v1337, 0.0
        %v1343 = vsel %vm1333, %v1341, 0.0
        %v1344 = vadd.f32 %v1234, %v1342
        %v1345 = vadd.f32 %v1235, %v1343
        %v1348 = vrot.slane %v1327, 5
        %v1349 = vrot.slane %v1328, 5
        %1352 = vmatprep.subr.mxu0 %v660
        %1353 = vmatpush1.msra.mxu0 %v659
        %1354 = vmatprep.subr.mxu0 %v658
        %1355 = vmatpush1.msra.mxu0 %v657
        %1356 = vmatprep.subr.mxu0 %v656
        %1357 = vmatpush1.msra.mxu0 %v655
        %1358 = vmatprep.subr.mxu0 %v654
        %1359 = vmatpush1.msra.mxu0 %v653
        %1360 = vmatprep.subr.mxu0 %v652
        %1361 = vmatpush1.msra.mxu0 %v651
        %1362 = vmatprep.subr.mxu0 %v650
        %1363 = vmatpush1.msra.mxu0 %v649
        %1364 = vmatprep.subr.mxu0 %v648
        %1365 = vmatpush1.msra.mxu0 %v647
        %1366 = vmatprep.subr.mxu0 %v646
        %1367 = vmatpush1.msra.mxu0 %v645
        %1368 = vmatprep.subr.mxu0 %v644
        %1369 = vmatpush1.msra.mxu0 %v643
        %1370 = vmatprep.subr.mxu0 %v642
        %1371 = vmatpush1.msra.mxu0 %v641
        %1372 = vmatprep.subr.mxu0 %v640
        %1373 = vmatpush1.msra.mxu0 %v639
        %1374 = vmatprep.subr.mxu0 %v638
        %1375 = vmatpush1.msra.mxu0 %v637
        %1376 = vmatprep.subr.mxu0 %v636
        %1377 = vmatpush1.msra.mxu0 %v635
        %1378 = vmatprep.subr.mxu0 %v634
        %1379 = vmatpush1.msra.mxu0 %v633
        %1380 = vmatprep.subr.mxu0 %v632
        %1381 = vmatpush1.msra.mxu0 %v631
        %1382 = vmatprep.subr.mxu0 %v630
        %1383 = vmatpush1.msra.mxu0 %v629
        %1384 = vmatprep.subr.mxu0 %v692
        %1385 = vmatpush2.msra.mxu0 %v691
        %1386 = vmatprep.subr.mxu0 %v690
        %1387 = vmatpush2.msra.mxu0 %v689
        %1388 = vmatprep.subr.mxu0 %v688
        %1389 = vmatpush2.msra.mxu0 %v687
        %1390 = vmatprep.subr.mxu0 %v686
        %1391 = vmatpush2.msra.mxu0 %v685
        %1392 = vmatprep.subr.mxu0 %v684
        %1393 = vmatpush2.msra.mxu0 %v683
        %1394 = vmatprep.subr.mxu0 %v682
        %1395 = vmatpush2.msra.mxu0 %v681
        %1396 = vmatprep.subr.mxu0 %v680
        %1397 = vmatpush2.msra.mxu0 %v679
        %1398 = vmatprep.subr.mxu0 %v678
        %1399 = vmatpush2.msra.mxu0 %v677
        %1400 = vmatprep.subr.mxu0 %v676
        %1401 = vmatpush2.msra.mxu0 %v675
        %1402 = vmatprep.subr.mxu0 %v674
        %1403 = vmatpush2.msra.mxu0 %v673
        %1404 = vmatprep.subr.mxu0 %v672
        %1405 = vmatpush2.msra.mxu0 %v671
        %1406 = vmatprep.subr.mxu0 %v670
        %1407 = vmatpush2.msra.mxu0 %v669
        %1408 = vmatprep.subr.mxu0 %v668
        %1409 = vmatpush2.msra.mxu0 %v667
        %1410 = vmatprep.subr.mxu0 %v666
        %1411 = vmatpush2.msra.mxu0 %v665
        %1412 = vmatprep.subr.mxu0 %v664
        %1413 = vmatpush2.msra.mxu0 %v663
        %1414 = vmatprep.subr.mxu0 %v662
        %1415 = vmatpush2.msra.mxu0 %v661
        %1416 = vmatprep.mubr.f32.mxu0 %v1349
        %1417 = vmatmul.mubr.f32.gmra.mxu0 %v1348
        %v1418 = vpop.f32.mrf.mxu0
        %v1419 = vadd.f32 0.0, %v1418
        %v1420 = vpop.f32.mrf.mxu0
        %v1421 = vadd.f32 0.0, %v1420
        %1422 = vdwg.mxu0
        %v1425 = vrot.slane %v1419, 2
        %v1426 = vrot.slane %v1421, 2
        %v1429 = vadd.f32 %v624, %v1425
        %v1430 = vadd.f32 %v625, %v1426
        %v1431 = vtanh.pop %v1429
        %v1432 = vtanh.pop %v1430
        %v1433 = vrot.slane %v1327, 7
        %v1434 = vrot.slane %v1328, 7
        %v1437 = vsel %vm779, %v1431, %v1433
        %v1438 = vsel %vm780, %v1432, %v1434
        %vm1439 = vcmp.eq.s32.totalorder %v627, 6
        %v1440 = vmul.f32 %v594, %v1437
        %v1441 = vmul.f32 %v596, %v1438
        %v1442 = vsel %vm1439, 1, 0
        %vm1443 = vcmp.eq.s32.totalorder %v1442, 1
        %v1444 = vlaneseq
        %v1445 = vshrl.u32 %v1444, 7
        %v1446 = vsub.s32 6, %v1445
        %v1447 = vrot.slane %v1440, %v1446
        %v1448 = vlaneseq
        %v1449 = vshrl.u32 %v1448, 7
        %v1450 = vsub.s32 6, %v1449
        %v1451 = vrot.slane %v1441, %v1450
        %v1452 = vsel %vm1443, %v1447, 0.0
        %v1453 = vsel %vm1443, %v1451, 0.0
        %v1454 = vadd.f32 %v1344, %v1452
        %v1455 = vadd.f32 %v1345, %v1453
        %v1458 = vrot.slane %v1437, 6
        %v1459 = vrot.slane %v1438, 6
        %1462 = vmatprep.subr.mxu0 %v660
        %1463 = vmatpush1.msra.mxu0 %v659
        %1464 = vmatprep.subr.mxu0 %v658
        %1465 = vmatpush1.msra.mxu0 %v657
        %1466 = vmatprep.subr.mxu0 %v656
        %1467 = vmatpush1.msra.mxu0 %v655
        %1468 = vmatprep.subr.mxu0 %v654
        %1469 = vmatpush1.msra.mxu0 %v653
        %1470 = vmatprep.subr.mxu0 %v652
        %1471 = vmatpush1.msra.mxu0 %v651
        %1472 = vmatprep.subr.mxu0 %v650
        %1473 = vmatpush1.msra.mxu0 %v649
        %1474 = vmatprep.subr.mxu0 %v648
        %1475 = vmatpush1.msra.mxu0 %v647
        %1476 = vmatprep.subr.mxu0 %v646
        %1477 = vmatpush1.msra.mxu0 %v645
        %1478 = vmatprep.subr.mxu0 %v644
        %1479 = vmatpush1.msra.mxu0 %v643
        %1480 = vmatprep.subr.mxu0 %v642
        %1481 = vmatpush1.msra.mxu0 %v641
        %1482 = vmatprep.subr.mxu0 %v640
        %1483 = vmatpush1.msra.mxu0 %v639
        %1484 = vmatprep.subr.mxu0 %v638
        %1485 = vmatpush1.msra.mxu0 %v637
        %1486 = vmatprep.subr.mxu0 %v636
        %1487 = vmatpush1.msra.mxu0 %v635
        %1488 = vmatprep.subr.mxu0 %v634
        %1489 = vmatpush1.msra.mxu0 %v633
        %1490 = vmatprep.subr.mxu0 %v632
        %1491 = vmatpush1.msra.mxu0 %v631
        %1492 = vmatprep.subr.mxu0 %v630
        %1493 = vmatpush1.msra.mxu0 %v629
        %1494 = vmatprep.subr.mxu0 %v692
        %1495 = vmatpush2.msra.mxu0 %v691
        %1496 = vmatprep.subr.mxu0 %v690
        %1497 = vmatpush2.msra.mxu0 %v689
        %1498 = vmatprep.subr.mxu0 %v688
        %1499 = vmatpush2.msra.mxu0 %v687
        %1500 = vmatprep.subr.mxu0 %v686
        %1501 = vmatpush2.msra.mxu0 %v685
        %1502 = vmatprep.subr.mxu0 %v684
        %1503 = vmatpush2.msra.mxu0 %v683
        %1504 = vmatprep.subr.mxu0 %v682
        %1505 = vmatpush2.msra.mxu0 %v681
        %1506 = vmatprep.subr.mxu0 %v680
        %1507 = vmatpush2.msra.mxu0 %v679
        %1508 = vmatprep.subr.mxu0 %v678
        %1509 = vmatpush2.msra.mxu0 %v677
        %1510 = vmatprep.subr.mxu0 %v676
        %1511 = vmatpush2.msra.mxu0 %v675
        %1512 = vmatprep.subr.mxu0 %v674
        %1513 = vmatpush2.msra.mxu0 %v673
        %1514 = vmatprep.subr.mxu0 %v672
        %1515 = vmatpush2.msra.mxu0 %v671
        %1516 = vmatprep.subr.mxu0 %v670
        %1517 = vmatpush2.msra.mxu0 %v669
        %1518 = vmatprep.subr.mxu0 %v668
        %1519 = vmatpush2.msra.mxu0 %v667
        %1520 = vmatprep.subr.mxu0 %v666
        %1521 = vmatpush2.msra.mxu0 %v665
        %1522 = vmatprep.subr.mxu0 %v664
        %1523 = vmatpush2.msra.mxu0 %v663
        %1524 = vmatprep.subr.mxu0 %v662
        %1525 = vmatpush2.msra.mxu0 %v661
        %1526 = vmatprep.mubr.f32.mxu0 %v1459
        %1527 = vmatmul.mubr.f32.gmra.mxu0 %v1458
        %v1528 = vpop.f32.mrf.mxu0
        %v1529 = vadd.f32 0.0, %v1528
        %v1530 = vpop.f32.mrf.mxu0
        %v1531 = vadd.f32 0.0, %v1530
        %1532 = vdwg.mxu0
        %v1535 = vrot.slane %v1529, 1
        %v1536 = vrot.slane %v1531, 1
        %v1539 = vadd.f32 %v624, %v1535
        %v1540 = vadd.f32 %v625, %v1536
        %v1541 = vtanh.pop %v1539
        %v1542 = vtanh.pop %v1540
        %v1543 = vrot.slane %v1437, 7
        %v1544 = vrot.slane %v1438, 7
        %v1547 = vsel %vm779, %v1541, %v1543
        %v1548 = vsel %vm780, %v1542, %v1544
        %vm1549 = vcmp.eq.s32.totalorder %v627, 7
        %v1550 = vmul.f32 %v594, %v1547
        %v1551 = vmul.f32 %v596, %v1548
        %v1552 = vsel %vm1549, 1, 0
        %vm1553 = vcmp.eq.s32.totalorder %v1552, 1
        %v1554 = vlaneseq
        %v1555 = vshrl.u32 %v1554, 7
        %v1556 = vsub.s32 7, %v1555
        %v1557 = vrot.slane %v1550, %v1556
        %v1558 = vlaneseq
        %v1559 = vshrl.u32 %v1558, 7
        %v1560 = vsub.s32 7, %v1559
        %v1561 = vrot.slane %v1551, %v1560
        %v1562 = vsel %vm1553, %v1557, 0.0
        %v1563 = vsel %vm1553, %v1561, 0.0
        %v1564 = vadd.f32 %v1454, %v1562
        %v1565 = vadd.f32 %v1455, %v1563
        %v1568 = vcombine.high %v1547, %v1548
        %v1570 = vunpack.c.l.s4 1966171168
        %v1571 = vunpack.c.0.s8 %v1570
        %v1572 = vlaneseq
        %v1573 = vshrl.u32 %v1572, 7
        %v1574 = vsub.s32 %v1571, %v1573
        %v1575 = vrot.slane %v1568, %v1574
        %v1576 = vcombine.high %v1575, %v1575
        %v1578 = vunpack.c.l.s4 1966171168
        %v1579 = vunpack.c.0.s8 %v1578
        %v1580 = vlaneseq
        %v1581 = vshrl.u32 %v1580, 7
        %v1582 = vsub.s32 %v1579, %v1581
        %v1583 = vrot.slane %v1576, %v1582
        %v1584 = vcombine.high %v1583, %v1583
        %v1586 = vlaneseq
        %vm1587 = vcmp.ge.s32.totalorder %v1586, 0
        %vm1588 = vcmp.lt.s32.totalorder %v1586, 256
        %vm1589 = vmand %vm1587, %vm1588
        %1590 = vst.msk [vmem:[#allocation2] sm:$0x3] %vm1589, %v1584
        %1591 = vst.msk [vmem:[%s9] sm:$0x3] %vm1589, %v1584
        %v1592 = vpack.c.bf16 %v1564, %v1564
        %v1593 = vpack.c.bf16 %v1565, %v1565
        %v1594 = vunpack.c.l.bf16 %v1592
        %v1595 = vunpack.c.l.bf16 %v1593
        %v1596 = vsub.f32 %v1564, %v1594
        %v1597 = vsub.f32 %v1565, %v1595
        %v1598 = vld [vmem:[%s7] sm:$0xff]
        %v1599 = vld [vmem:[%s7 + $0x8] sm:$0xff]
        %v1600 = vld [vmem:[%s7 + $0x10] sm:$0xff]
        %v1601 = vld [vmem:[%s7 + $0x18] sm:$0xff]
        %v1602 = vld [vmem:[%s7 + $0x20] sm:$0xff]
        %v1603 = vld [vmem:[%s7 + $0x28] sm:$0xff]
        %v1604 = vld [vmem:[%s7 + $0x30] sm:$0xff]
        %v1605 = vld [vmem:[%s7 + $0x38] sm:$0xff]
        %v1606 = vld [vmem:[%s7 + $0x40] sm:$0xff]
        %v1607 = vld [vmem:[%s7 + $0x48] sm:$0xff]
        %v1608 = vld [vmem:[%s7 + $0x50] sm:$0xff]
        %v1609 = vld [vmem:[%s7 + $0x58] sm:$0xff]
        %v1610 = vld [vmem:[%s7 + $0x60] sm:$0xff]
        %v1611 = vld [vmem:[%s7 + $0x68] sm:$0xff]
        %v1612 = vld [vmem:[%s7 + $0x70] sm:$0xff]
        %v1613 = vld [vmem:[%s7 + $0x78] sm:$0xff]
        %v1614 = vld [vmem:[%s7 + $0x80] sm:$0xff]
        %v1615 = vld [vmem:[%s7 + $0x88] sm:$0xff]
        %v1616 = vld [vmem:[%s7 + $0x90] sm:$0xff]
        %v1617 = vld [vmem:[%s7 + $0x98] sm:$0xff]
        %v1618 = vld [vmem:[%s7 + $0xa0] sm:$0xff]
        %v1619 = vld [vmem:[%s7 + $0xa8] sm:$0xff]
        %v1620 = vld [vmem:[%s7 + $0xb0] sm:$0xff]
        %v1621 = vld [vmem:[%s7 + $0xb8] sm:$0xff]
        %v1622 = vld [vmem:[%s7 + $0xc0] sm:$0xff]
        %v1623 = vld [vmem:[%s7 + $0xc8] sm:$0xff]
        %v1624 = vld [vmem:[%s7 + $0xd0] sm:$0xff]
        %v1625 = vld [vmem:[%s7 + $0xd8] sm:$0xff]
        %v1626 = vld [vmem:[%s7 + $0xe0] sm:$0xff]
        %v1627 = vld [vmem:[%s7 + $0xe8] sm:$0xff]
        %v1628 = vld [vmem:[%s7 + $0xf0] sm:$0xff]
        %v1629 = vld [vmem:[%s7 + $0xf8] sm:$0xff]
        %1630 = vmatprep.subr.mxu0 0.0
        %1631 = vmatpush1.msra.mxu0 %v1613
        %1632 = vmatprep.subr.mxu0 0.0
        %1633 = vmatpush1.msra.mxu0 %v1612
        %1634 = vmatprep.subr.mxu0 0.0
        %1635 = vmatpush1.msra.mxu0 %v1611
        %1636 = vmatprep.subr.mxu0 0.0
        %1637 = vmatpush1.msra.mxu0 %v1610
        %1638 = vmatprep.subr.mxu0 0.0
        %1639 = vmatpush1.msra.mxu0 %v1609
        %1640 = vmatprep.subr.mxu0 0.0
        %1641 = vmatpush1.msra.mxu0 %v1608
        %1642 = vmatprep.subr.mxu0 0.0
        %1643 = vmatpush1.msra.mxu0 %v1607
        %1644 = vmatprep.subr.mxu0 0.0
        %1645 = vmatpush1.msra.mxu0 %v1606
        %1646 = vmatprep.subr.mxu0 0.0
        %1647 = vmatpush1.msra.mxu0 %v1605
        %1648 = vmatprep.subr.mxu0 0.0
        %1649 = vmatpush1.msra.mxu0 %v1604
        %1650 = vmatprep.subr.mxu0 0.0
        %1651 = vmatpush1.msra.mxu0 %v1603
        %1652 = vmatprep.subr.mxu0 0.0
        %1653 = vmatpush1.msra.mxu0 %v1602
        %1654 = vmatprep.subr.mxu0 0.0
        %1655 = vmatpush1.msra.mxu0 %v1601
        %1656 = vmatprep.subr.mxu0 0.0
        %1657 = vmatpush1.msra.mxu0 %v1600
        %1658 = vmatprep.subr.mxu0 0.0
        %1659 = vmatpush1.msra.mxu0 %v1599
        %1660 = vmatprep.subr.mxu0 0.0
        %1661 = vmatpush1.msra.mxu0 %v1598
        %1662 = vmatprep.subr.mxu0 0.0
        %1663 = vmatpush2.msra.mxu0 %v1629
        %1664 = vmatprep.subr.mxu0 0.0
        %1665 = vmatpush2.msra.mxu0 %v1628
        %1666 = vmatprep.subr.mxu0 0.0
        %1667 = vmatpush2.msra.mxu0 %v1627
        %1668 = vmatprep.subr.mxu0 0.0
        %1669 = vmatpush2.msra.mxu0 %v1626
        %1670 = vmatprep.subr.mxu0 0.0
        %1671 = vmatpush2.msra.mxu0 %v1625
        %1672 = vmatprep.subr.mxu0 0.0
        %1673 = vmatpush2.msra.mxu0 %v1624
        %1674 = vmatprep.subr.mxu0 0.0
        %1675 = vmatpush2.msra.mxu0 %v1623
        %1676 = vmatprep.subr.mxu0 0.0
        %1677 = vmatpush2.msra.mxu0 %v1622
        %1678 = vmatprep.subr.mxu0 0.0
        %1679 = vmatpush2.msra.mxu0 %v1621
        %1680 = vmatprep.subr.mxu0 0.0
        %1681 = vmatpush2.msra.mxu0 %v1620
        %1682 = vmatprep.subr.mxu0 0.0
        %1683 = vmatpush2.msra.mxu0 %v1619
        %1684 = vmatprep.subr.mxu0 0.0
        %1685 = vmatpush2.msra.mxu0 %v1618
        %1686 = vmatprep.subr.mxu0 0.0
        %1687 = vmatpush2.msra.mxu0 %v1617
        %1688 = vmatprep.subr.mxu0 0.0
        %1689 = vmatpush2.msra.mxu0 %v1616
        %1690 = vmatprep.subr.mxu0 0.0
        %1691 = vmatpush2.msra.mxu0 %v1615
        %1692 = vmatprep.subr.mxu0 0.0
        %1693 = vmatpush2.msra.mxu0 %v1614
        %1694 = vmatprep.mubr.f32.mxu0 %v1597
        %1695 = vmatmul.mubr.f32.gmra.mxu0 %v1596
        %v1696 = vpop.f32.mrf.mxu0
        %v1697 = vadd.f32 0.0, %v1696
        %v1698 = vpop.f32.mrf.mxu0
        %1699 = vdwg.mxu0
        %1700 = vmatprep.subr.mxu0 0.0
        %1701 = vmatpush1.msra.mxu0 %v1613
        %1702 = vmatprep.subr.mxu0 0.0
        %1703 = vmatpush1.msra.mxu0 %v1612
        %1704 = vmatprep.subr.mxu0 0.0
        %1705 = vmatpush1.msra.mxu0 %v1611
        %1706 = vmatprep.subr.mxu0 0.0
        %1707 = vmatpush1.msra.mxu0 %v1610
        %1708 = vmatprep.subr.mxu0 0.0
        %1709 = vmatpush1.msra.mxu0 %v1609
        %1710 = vmatprep.subr.mxu0 0.0
        %1711 = vmatpush1.msra.mxu0 %v1608
        %1712 = vmatprep.subr.mxu0 0.0
        %1713 = vmatpush1.msra.mxu0 %v1607
        %1714 = vmatprep.subr.mxu0 0.0
        %1715 = vmatpush1.msra.mxu0 %v1606
        %1716 = vmatprep.subr.mxu0 0.0
        %1717 = vmatpush1.msra.mxu0 %v1605
        %1718 = vmatprep.subr.mxu0 0.0
        %1719 = vmatpush1.msra.mxu0 %v1604
        %1720 = vmatprep.subr.mxu0 0.0
        %1721 = vmatpush1.msra.mxu0 %v1603
        %1722 = vmatprep.subr.mxu0 0.0
        %1723 = vmatpush1.msra.mxu0 %v1602
        %1724 = vmatprep.subr.mxu0 0.0
        %1725 = vmatpush1.msra.mxu0 %v1601
        %1726 = vmatprep.subr.mxu0 0.0
        %1727 = vmatpush1.msra.mxu0 %v1600
        %1728 = vmatprep.subr.mxu0 0.0
        %1729 = vmatpush1.msra.mxu0 %v1599
        %1730 = vmatprep.subr.mxu0 0.0
        %1731 = vmatpush1.msra.mxu0 %v1598
        %1732 = vmatprep.subr.mxu0 0.0
        %1733 = vmatpush2.msra.mxu0 %v1629
        %1734 = vmatprep.subr.mxu0 0.0
        %1735 = vmatpush2.msra.mxu0 %v1628
        %1736 = vmatprep.subr.mxu0 0.0
        %1737 = vmatpush2.msra.mxu0 %v1627
        %1738 = vmatprep.subr.mxu0 0.0
        %1739 = vmatpush2.msra.mxu0 %v1626
        %1740 = vmatprep.subr.mxu0 0.0
        %1741 = vmatpush2.msra.mxu0 %v1625
        %1742 = vmatprep.subr.mxu0 0.0
        %1743 = vmatpush2.msra.mxu0 %v1624
        %1744 = vmatprep.subr.mxu0 0.0
        %1745 = vmatpush2.msra.mxu0 %v1623
        %1746 = vmatprep.subr.mxu0 0.0
        %1747 = vmatpush2.msra.mxu0 %v1622
        %1748 = vmatprep.subr.mxu0 0.0
        %1749 = vmatpush2.msra.mxu0 %v1621
        %1750 = vmatprep.subr.mxu0 0.0
        %1751 = vmatpush2.msra.mxu0 %v1620
        %1752 = vmatprep.subr.mxu0 0.0
        %1753 = vmatpush2.msra.mxu0 %v1619
        %1754 = vmatprep.subr.mxu0 0.0
        %1755 = vmatpush2.msra.mxu0 %v1618
        %1756 = vmatprep.subr.mxu0 0.0
        %1757 = vmatpush2.msra.mxu0 %v1617
        %1758 = vmatprep.subr.mxu0 0.0
        %1759 = vmatpush2.msra.mxu0 %v1616
        %1760 = vmatprep.subr.mxu0 0.0
        %1761 = vmatpush2.msra.mxu0 %v1615
        %1762 = vmatprep.subr.mxu0 0.0
        %1763 = vmatpush2.msra.mxu0 %v1614
        %1764 = vmatprep.mubr.f32.mxu0 %v1595
        %1765 = vmatmul.mubr.f32.gmra.mxu0 %v1594
        %v1766 = vpop.f32.mrf.mxu0
        %v1767 = vadd.f32 %v1697, %v1766
        %v1768 = vpop.f32.mrf.mxu0
        %1769 = vdwg.mxu0
        %v1770 = vsel %vm375, %v369, 0.0
        %1771 = vadd.xlane.f32.xlu0 %v1770
        %v1772 = vpop.xlane.xlu0 %1771
        %v1773 = vmax.f32 %v1772, 1.0
        %v1774 = vrcp.pop %v1773
        %v1775 = vmul.f32 %v1767, %v1774
        %vm1776 = vcmask 261120
        %1777 = vst.msk [vmem:[%s357] sm:$0xff] %vm1776, %v1775
        %p1778 = scmp.lt.s32.totalorder %s22, 1
        %s1779 = scalar_select %p1778, %s22, 1
        %s1780 = smul.addr %s1779, 8
        %s1781 = scalar_lea.vmem %s8, %s1780
        // Predicated region
        $region61: #{forward.2} parent=51 // pred_check
          %p1782 = pneg %p218
        $region62: #{forward.2} parent=51 // pred_check_branch
          %1784 = sbr.rel (%p1782) target = $region64
        $region63: #{forward.2} parent=51 // pred_region
          _
        $region64: #{forward.2} parent=51 // pred_fallthru
          _
        // Predicated region
        $region65: #{forward.2} parent=51 // pred_check
          %p1785 = pneg %p239
        $region66: #{forward.2} parent=51 // pred_check_branch
          %1787 = sbr.rel (%p1785) target = $region68
        $region67: #{forward.2} parent=51 // pred_region
          _
        $region68: #{forward.2} parent=51 // pred_fallthru
          _
        // Predicated region
        $region69: #{forward.2} parent=51 // pred_check
          %p1788 = pneg %p239
        $region70: #{forward.2} parent=51 // pred_check_branch
          %1790 = sbr.rel (%p1788) target = $region72
        $region71: #{forward.2} parent=51 // pred_region
          _
        $region72: #{forward.2} parent=51 // pred_fallthru
          _
      $region52: #{forward.2} parent=5 // pred_fallthru
        _
      %p1791 = scmp.le.s32.totalorder 2, %s17
      // Predicated region
      $region73: #{forward.2} parent=5 // pred_check
        %p1792 = pneg %p1791
      $region74: #{forward.2} parent=5 // pred_check_branch
        %1794 = sbr.rel (%p1792) target = $region76
      $region75: #{forward.2} parent=5 // pred_region
        %s1795 = ssub.s32 %s17, 2
        // Predicated region
        $region77: #{forward.2} parent=75 // pred_check
          %p1796 = pneg %p224
        $region78: #{forward.2} parent=75 // pred_check_branch
          %1798 = sbr.rel (%p1796) target = $region80
        $region79: #{forward.2} parent=75 // pred_region
          %p1799 = scmp.lt.s32.totalorder %s23, 1
          %s1800 = scalar_select %p1799, %s23, 1
          %s1801 = smul.addr %s1800, 8
          %s1802 = scalar_lea.vmem %s8, %s1801
        $region80: #{forward.2} parent=75 // pred_fallthru
          _
      $region76: #{forward.2} parent=5 // pred_fallthru
        _
    $region6: #{forward.2} parent=1 // loop_footer
      %s21 = sadd.s32 1, %s17
    $region7: #{forward.2} parent=1 // loop_footer_branch
      %16 = sbr.rel target = $region3
    $region8: #{forward.2} parent=1 // loop_exit
      _
    %1803 = vsyncpa [#allocation4], 1
    %s1804 = scalar_lea.sflag [#allocation4], 1
    %1805 = vsyncpa %s1804, 1

</llo_original>
